<compile_context>
chip_gen: v7x
topology: tpu7x:2x2x1
jax: 0.10.0
libtpu: 0.0.40
codegen_flags: <defaults>
</compile_context>

<pallas_src>
import jax
import jax.numpy as jnp
from jax.experimental import pallas as pl
from jax.experimental.pallas import tpu as pltpu

# Synthetic small CLIP text encoder dimensions
B = 2         # batch
L = 8         # context length (n_ctx)
V = 64        # vocab size
D = 32        # transformer width (d_model)
H = 4         # attention heads
HD = D // H   # head dim
F = 4 * D     # MLP hidden width
NLAYERS = 2   # transformer layers
E = 16        # text embedding dim (text_projection output)
EPS = 1e-5    # LayerNorm eps (PyTorch default)
BL = B * L    # batch rows folded into the matmul row axis


def _layernorm(x, w, b):
    mean = jnp.mean(x, axis=-1, keepdims=True)
    var = jnp.mean(jnp.square(x - mean), axis=-1, keepdims=True)
    return (x - mean) * jax.lax.rsqrt(var + EPS) * w + b


# --------------------------- fused Pallas kernel ---------------------------

def clip_text_kernel(eot_ref, x_ref,
                     ln1w_ref, ln1b_ref, qkvw_ref, qkvb_ref,
                     ow_ref, ob_ref, ln2w_ref, ln2b_ref,
                     fcw_ref, fcb_ref, pw_ref, pb_ref,
                     lnfw_ref, lnfb_ref, tp_ref,
                     o_ref, x_sc):
    """One transformer layer per grid step; activations carried in a VMEM scratch."""
    l = pl.program_id(0)

    @pl.when(l == 0)
    def _():
        x_sc[...] = x_ref[...]                  # [BL, D] token + positional embeddings

    x = x_sc[...]                               # [BL, D] f32 residual stream

    # Block-diagonal causal mask over the flattened [BL, BL] score matrix:
    # allowed iff (query, key) are in the same sequence AND key pos <= query pos.
    # Built from comparisons only (no int div/mod), static B-unrolled.
    qp = jax.lax.broadcasted_iota(jnp.int32, (BL, BL), 0)
    kp = jax.lax.broadcasted_iota(jnp.int32, (BL, BL), 1)
    same_seq = None
    for bb in range(B):
        qin = jnp.logical_and(qp >= bb * L, qp < (bb + 1) * L)
        kin = jnp.logical_and(kp >= bb * L, kp < (bb + 1) * L)
        blk = jnp.logical_and(qin, kin)
        same_seq = blk if same_seq is None else jnp.logical_or(same_seq, blk)
    allow = jnp.logical_and(same_seq, kp <= qp).astype(jnp.float32)   # [BL, BL] 0/1

    # ---- pre-LN multi-head self-attention ----
    xn = _layernorm(x, ln1w_ref[0], ln1b_ref[0])                       # [BL, D] f32
    # One fused, lane-dense QKV matmul (q_w/q_b already carry the HD**-0.5 scale).
    qkv = jnp.dot(xn.astype(jnp.bfloat16), qkvw_ref[0],
                  preferred_element_type=jnp.float32) + qkvb_ref[0]    # [BL, 3D] f32
    q = qkv[:, 0 * D:1 * D].astype(jnp.bfloat16)
    k = qkv[:, 1 * D:2 * D].astype(jnp.bfloat16)
    v = qkv[:, 2 * D:3 * D].astype(jnp.bfloat16)

    heads = []
    for h in range(H):                          # static; heads sliced only for score/attend
        qh = q[:, h * HD:(h + 1) * HD]          # [BL, HD]
        kh = k[:, h * HD:(h + 1) * HD]
        vh = v[:, h * HD:(h + 1) * HD]
        s = jnp.einsum('qe,ke->qk', qh, kh,
                       preferred_element_type=jnp.float32)             # [BL, BL] f32
        p = jnp.exp(s) * allow                  # multiplicative mask: no inf, no max-reduce
        p = p * pl.reciprocal(jnp.sum(p, axis=-1, keepdims=True), approx=False)
        heads.append(jnp.einsum('qk,ke->qe', p.astype(jnp.bfloat16), vh,
                                preferred_element_type=jnp.float32))   # [BL, HD] f32
    attn = jnp.concatenate(heads, axis=-1)      # [BL, D] lane-dense head reassembly
    x = x + jnp.dot(attn.astype(jnp.bfloat16), ow_ref[0],
                    preferred_element_type=jnp.float32) + ob_ref[0]

    # ---- pre-LN MLP with QuickGELU: h * sigmoid(1.702 h) ----
    xn2 = _layernorm(x, ln2w_ref[0], ln2b_ref[0])
    h1 = jnp.dot(xn2.astype(jnp.bfloat16), fcw_ref[0],
                 preferred_element_type=jnp.float32) + fcb_ref[0]
    h1 = h1 * jax.nn.sigmoid(1.702 * h1)
    x = x + jnp.dot(h1.astype(jnp.bfloat16), pw_ref[0],
                    preferred_element_type=jnp.float32) + pb_ref[0]

    x_sc[...] = x                               # carry residual stream to next layer step

    # ---- last layer: EOT gather (one-hot matmul), ln_final, text_projection ----
    @pl.when(l == NLAYERS - 1)
    def _():
        rows = []
        for bb in range(B):                     # static
            tgt = eot_ref[bb] + bb * L
            rows.append((jax.lax.broadcasted_iota(jnp.int32, (1, BL), 1) == tgt)
                        .astype(jnp.float32))
        sel = jnp.concatenate(rows, axis=0)                              # [B, BL] one-hot
        row = jnp.dot(sel, x, preferred_element_type=jnp.float32)        # [B, D]
        rown = _layernorm(row, lnfw_ref[...], lnfb_ref[...])             # LN commutes w/ gather
        o_ref[...] = jnp.dot(rown, tp_ref[...],
                             preferred_element_type=jnp.float32)         # [B, E], one store


# --------------------------- wrapper ---------------------------

def _layer_spec(shape):
    """Per-layer-stacked weight: stream one layer per grid step."""
    n_rest = len(shape) - 1
    return pl.BlockSpec((1,) + tuple(shape[1:]),
                        lambda l, eot_ref, _n=n_rest: (l,) + (0,) * _n)


def _const_spec(shape):
    """Constant-index block: DMA'd once, stays resident across the layer grid."""
    n = len(shape)
    return pl.BlockSpec(tuple(shape), lambda l, eot_ref, _n=n: (0,) * _n)


def pack_params(params):
    """Stack per-layer weights on a leading [NLAYERS] axis; fuse QKV; bf16 MXU weights."""
    def stack(key):
        return jnp.stack([lp[key] for lp in params["layers"]], axis=0)

    # Fold the HD**-0.5 query scale into the q third of the fused QKV weight/bias.
    qscale = jnp.concatenate([jnp.full((D,), HD ** -0.5, jnp.float32),
                              jnp.ones((2 * D,), jnp.float32)])
    qkv_w = stack("qkv_w") * qscale[None, None, :]                     # [NL, D, 3D]
    qkv_b = stack("qkv_b") * qscale[None, None, :]                     # [NL, 1, 3D]

    return {
        "ln1_w": stack("ln1_w"), "ln1_b": stack("ln1_b"),              # f32 (VPU math)
        "qkv_w": qkv_w.astype(jnp.bfloat16), "qkv_b": qkv_b,
        "out_w": stack("out_w").astype(jnp.bfloat16), "out_b": stack("out_b"),
        "ln2_w": stack("ln2_w"), "ln2_b": stack("ln2_b"),
        "fc_w": stack("fc_w").astype(jnp.bfloat16), "fc_b": stack("fc_b"),
        "proj_w": stack("proj_w").astype(jnp.bfloat16), "proj_b": stack("proj_b"),
        "lnf_w": params["lnf_w"], "lnf_b": params["lnf_b"],            # f32
        "text_proj": params["text_proj"],                              # f32 (tiny, parity)
    }


def _cost_estimate(arrays):
    per_layer = (2 * BL * D * 3 * D        # fused QKV projection
                 + 4 * BL * BL * D         # scores + attend over all heads
                 + 2 * BL * D * D          # output projection
                 + 4 * BL * D * F)         # MLP (fc + proj)
    flops = NLAYERS * per_layer + 2 * B * BL * D + 2 * B * D * E
    transcendentals = NLAYERS * (H * BL * BL + BL * F)
    bytes_accessed = sum(int(a.size) * a.dtype.itemsize for a in arrays) + B * E * 4
    return pl.CostEstimate(flops=flops, transcendentals=transcendentals,
                           bytes_accessed=bytes_accessed)


def run_clip_text(x_flat, eot, p):
    layer_ws = [p["ln1_w"], p["ln1_b"], p["qkv_w"], p["qkv_b"],
                p["out_w"], p["out_b"], p["ln2_w"], p["ln2_b"],
                p["fc_w"], p["fc_b"], p["proj_w"], p["proj_b"]]
    const_ws = [p["lnf_w"], p["lnf_b"], p["text_proj"]]

    in_specs = ([pl.BlockSpec((BL, D), lambda l, eot_ref: (0, 0))]      # activations, resident
                + [_layer_spec(w.shape) for w in layer_ws]              # streamed per layer
                + [_const_spec(w.shape) for w in const_ws])             # resident constants
    # Constant-index blocks keep the default buffering here; at production sizes apply
    # pipeline_mode=pl.Buffered(1) (or verify the compiler collapses them) for VMEM headroom.

    out = pl.pallas_call(
        clip_text_kernel,
        out_shape=jax.ShapeDtypeStruct((B, E), jnp.float32),
        grid_spec=pltpu.PrefetchScalarGridSpec(
            num_scalar_prefetch=1,
            grid=(NLAYERS,),                      # layer-streamed; activations in scratch
            in_specs=in_specs,
            out_specs=pl.BlockSpec((B, E), lambda l, eot_ref: (0, 0)),
            scratch_shapes=[pltpu.VMEM((BL, D), jnp.float32)],
        ),
        compiler_params=pltpu.CompilerParams(dimension_semantics=("arbitrary",)),
        cost_estimate=_cost_estimate([x_flat, eot] + layer_ws + const_ws),
    )(eot, x_flat, *layer_ws, *const_ws)
    return out                                   # [B, E]


def encode_text(text, params):
    # Embedding lookup (gather) and EOT argmax are plain-JAX glue.
    x = jnp.take(params["tok_emb"], text, axis=0) + params["pos_emb"][None]   # [B, L, D]
    eot = jnp.argmax(text, axis=-1).astype(jnp.int32)   # EOT token has highest id (CLIP)
    return run_clip_text(x.reshape(BL, D), eot, pack_params(params))


# --------------------------- params & reference ---------------------------

def init_params(key):
    ks = iter(jax.random.split(key, 64))
    nrm = lambda shape, scale: jax.random.normal(next(ks), shape, jnp.float32) * scale
    params = {
        "tok_emb": nrm((V, D), 0.02),
        "pos_emb": nrm((L, D), 0.01),
        "lnf_w": 1.0 + nrm((1, D), 0.1),
        "lnf_b": nrm((1, D), 0.1),
        "text_proj": nrm((D, E), D ** -0.5),
        "layers": [],
    }
    for _ in range(NLAYERS):
        params["layers"].append({
            "ln1_w": 1.0 + nrm((1, D), 0.1),
            "ln1_b": nrm((1, D), 0.1),
            "qkv_w": nrm((D, 3 * D), D ** -0.5),   # in_proj_weight.T
            "qkv_b": nrm((1, 3 * D), 0.02),
            "out_w": nrm((D, D), D ** -0.5),       # out_proj.weight.T
            "out_b": nrm((1, D), 0.02),
            "ln2_w": 1.0 + nrm((1, D), 0.1),
            "ln2_b": nrm((1, D), 0.1),
            "fc_w": nrm((D, F), D ** -0.5),        # mlp.c_fc.weight.T
            "fc_b": nrm((1, F), 0.02),
            "proj_w": nrm((F, D), F ** -0.5),      # mlp.c_proj.weight.T
            "proj_b": nrm((1, D), 0.02),
        })
    return params


def reference_encode_text(text, params):
    mask = jnp.triu(jnp.full((L, L), float("-inf"), jnp.float32), k=1)
    x = jnp.take(params["tok_emb"], text, axis=0) + params["pos_emb"][None]
    for lp in params["layers"]:
        xn = _layernorm(x, lp["ln1_w"], lp["ln1_b"])
        qkv = xn @ lp["qkv_w"] + lp["qkv_b"]
        q, k, v = jnp.split(qkv, 3, axis=-1)
        q = q.reshape(B, L, H, HD).transpose(0, 2, 1, 3) * (HD ** -0.5)
        k = k.reshape(B, L, H, HD).transpose(0, 2, 1, 3)
        v = v.reshape(B, L, H, HD).transpose(0, 2, 1, 3)
        s = jnp.einsum("bhqd,bhkd->bhqk", q, k) + mask
        p = jax.nn.softmax(s, axis=-1)
        a = jnp.einsum("bhqk,bhkd->bhqd", p, v).transpose(0, 2, 1, 3).reshape(B, L, D)
        x = x + a @ lp["out_w"] + lp["out_b"]
        xn2 = _layernorm(x, lp["ln2_w"], lp["ln2_b"])
        h1 = xn2 @ lp["fc_w"] + lp["fc_b"]
        h1 = h1 * jax.nn.sigmoid(1.702 * h1)
        x = x + h1 @ lp["proj_w"] + lp["proj_b"]
    xf = _layernorm(x, params["lnf_w"], params["lnf_b"])
    eot = jnp.argmax(text, axis=-1)
    return xf[jnp.arange(B), eot] @ params["text_proj"]


if __name__ == "__main__":
    key = jax.random.PRNGKey(0)
    params = init_params(key)

    # Deterministic token ids: SOT (V-2) at pos 0, random body, EOT (V-1 = max id)
    # at a per-sequence position so argmax picks it (CLIP convention).
    body = jax.random.randint(jax.random.fold_in(key, 123), (B, L), 1, V - 2)
    text = body.at[:, 0].set(V - 2)
    eot_pos = jnp.array([L - 1, L - 3], dtype=jnp.int32)
    text = text.at[jnp.arange(B), eot_pos].set(V - 1).astype(jnp.int32)

    out = jax.block_until_ready(encode_text(text, params))
    ref = jax.block_until_ready(reference_encode_text(text, params))

    assert out.shape == (B, E), out.shape
    # Tolerance accounts for bf16 MXU operands (f32 accumulation) vs the f32 reference.
    assert jnp.allclose(out, ref, rtol=3e-2, atol=3e-2), (out, ref)
    print("KERNEL_OK")
</pallas_src>

<mosaic_0001>
module attributes {stable_mosaic.version = 11 : i64} {
  func.func @clip_text_kernel(%arg0: i32, %arg1: memref<2xi32, #tpu.memory_space<smem>>, %arg2: memref<16x32xf32, #tpu.memory_space<vmem>>, %arg3: memref<1x1x32xf32, #tpu.memory_space<vmem>>, %arg4: memref<1x1x32xf32, #tpu.memory_space<vmem>>, %arg5: memref<1x32x96xbf16, #tpu.memory_space<vmem>>, %arg6: memref<1x1x96xf32, #tpu.memory_space<vmem>>, %arg7: memref<1x32x32xbf16, #tpu.memory_space<vmem>>, %arg8: memref<1x1x32xf32, #tpu.memory_space<vmem>>, %arg9: memref<1x1x32xf32, #tpu.memory_space<vmem>>, %arg10: memref<1x1x32xf32, #tpu.memory_space<vmem>>, %arg11: memref<1x32x128xbf16, #tpu.memory_space<vmem>>, %arg12: memref<1x1x128xf32, #tpu.memory_space<vmem>>, %arg13: memref<1x128x32xbf16, #tpu.memory_space<vmem>>, %arg14: memref<1x1x32xf32, #tpu.memory_space<vmem>>, %arg15: memref<1x32xf32, #tpu.memory_space<vmem>>, %arg16: memref<1x32xf32, #tpu.memory_space<vmem>>, %arg17: memref<32x16xf32, #tpu.memory_space<vmem>>, %arg18: memref<2x16xf32, #tpu.memory_space<vmem>>, %arg19: memref<16x32xf32, #tpu.memory_space<vmem>>) attributes {dimension_semantics = [#tpu.dimension_semantics<arbitrary>], iteration_bounds = array<i64: 2>, scalar_prefetch = 1 : i64, scratch_operands = 1 : i64, tpu.core_type = #tpu.core_type<tc>, window_params = [{pipeline_mode = #tpu.pipeline_mode<synchronous>, transform_indices = @transform_0, window_bounds = array<i64: 16, 32>}, {transform_indices = @transform_1, window_bounds = array<i64: 1, 1, 32>}, {transform_indices = @transform_2, window_bounds = array<i64: 1, 1, 32>}, {transform_indices = @transform_3, window_bounds = array<i64: 1, 32, 96>}, {transform_indices = @transform_4, window_bounds = array<i64: 1, 1, 96>}, {transform_indices = @transform_5, window_bounds = array<i64: 1, 32, 32>}, {transform_indices = @transform_6, window_bounds = array<i64: 1, 1, 32>}, {transform_indices = @transform_7, window_bounds = array<i64: 1, 1, 32>}, {transform_indices = @transform_8, window_bounds = array<i64: 1, 1, 32>}, {transform_indices = @transform_9, window_bounds = array<i64: 1, 32, 128>}, {transform_indices = @transform_10, window_bounds = array<i64: 1, 1, 128>}, {transform_indices = @transform_11, window_bounds = array<i64: 1, 128, 32>}, {transform_indices = @transform_12, window_bounds = array<i64: 1, 1, 32>}, {pipeline_mode = #tpu.pipeline_mode<synchronous>, transform_indices = @transform_13, window_bounds = array<i64: 1, 32>}, {pipeline_mode = #tpu.pipeline_mode<synchronous>, transform_indices = @transform_14, window_bounds = array<i64: 1, 32>}, {pipeline_mode = #tpu.pipeline_mode<synchronous>, transform_indices = @transform_15, window_bounds = array<i64: 32, 16>}, {pipeline_mode = #tpu.pipeline_mode<synchronous>, transform_indices = @transform_16, window_bounds = array<i64: 2, 16>}]} {
    %c0_i32 = arith.constant 0 : i32
    %0 = arith.cmpi eq, %arg0, %c0_i32 : i32
    %1 = arith.extui %0 : i1 to i32
    %c0_i32_0 = arith.constant 0 : i32
    %2 = arith.cmpi ne, %1, %c0_i32_0 : i32
    scf.if %2 {
      %c0_74 = arith.constant 0 : index
      %c0_75 = arith.constant 0 : index
      %190 = vector.load %arg2[%c0_74, %c0_75] : memref<16x32xf32, #tpu.memory_space<vmem>>, vector<16x32xf32>
      %c0_76 = arith.constant 0 : index
      %c0_77 = arith.constant 0 : index
      %191 = vector.load %arg19[%c0_76, %c0_77] : memref<16x32xf32, #tpu.memory_space<vmem>>, vector<16x32xf32>
      tpu.vector_store %arg19[%c0_76, %c0_77], %190 {strides = array<i32>} : memref<16x32xf32, #tpu.memory_space<vmem>>, vector<16x32xf32>,
    } else {
    }
    %c0 = arith.constant 0 : index
    %c0_1 = arith.constant 0 : index
    %3 = vector.load %arg19[%c0, %c0_1] : memref<16x32xf32, #tpu.memory_space<vmem>>, vector<16x32xf32>
    %4 = tpu.iota {dimensions = array<i32: 0>} : vector<16x16xi32>
    %5 = tpu.iota {dimensions = array<i32: 1>} : vector<16x16xi32>
    %c0_i32_2 = arith.constant 0 : i32
    %6 = vector.broadcast %c0_i32_2 : i32 to vector<16x16xi32>
    %7 = arith.cmpi sge, %4, %6 : vector<16x16xi32>
    %c8_i32 = arith.constant 8 : i32
    %8 = vector.broadcast %c8_i32 : i32 to vector<16x16xi32>
    %9 = arith.cmpi slt, %4, %8 : vector<16x16xi32>
    %10 = arith.andi %7, %9 : vector<16x16xi1>
    %c0_i32_3 = arith.constant 0 : i32
    %11 = vector.broadcast %c0_i32_3 : i32 to vector<16x16xi32>
    %12 = arith.cmpi sge, %5, %11 : vector<16x16xi32>
    %c8_i32_4 = arith.constant 8 : i32
    %13 = vector.broadcast %c8_i32_4 : i32 to vector<16x16xi32>
    %14 = arith.cmpi slt, %5, %13 : vector<16x16xi32>
    %15 = arith.andi %12, %14 : vector<16x16xi1>
    %16 = arith.andi %10, %15 : vector<16x16xi1>
    %c8_i32_5 = arith.constant 8 : i32
    %17 = vector.broadcast %c8_i32_5 : i32 to vector<16x16xi32>
    %18 = arith.cmpi sge, %4, %17 : vector<16x16xi32>
    %c16_i32 = arith.constant 16 : i32
    %19 = vector.broadcast %c16_i32 : i32 to vector<16x16xi32>
    %20 = arith.cmpi slt, %4, %19 : vector<16x16xi32>
    %21 = arith.andi %18, %20 : vector<16x16xi1>
    %c8_i32_6 = arith.constant 8 : i32
    %22 = vector.broadcast %c8_i32_6 : i32 to vector<16x16xi32>
    %23 = arith.cmpi sge, %5, %22 : vector<16x16xi32>
    %c16_i32_7 = arith.constant 16 : i32
    %24 = vector.broadcast %c16_i32_7 : i32 to vector<16x16xi32>
    %25 = arith.cmpi slt, %5, %24 : vector<16x16xi32>
    %26 = arith.andi %23, %25 : vector<16x16xi1>
    %27 = arith.andi %21, %26 : vector<16x16xi1>
    %28 = arith.ori %16, %27 : vector<16x16xi1>
    %29 = arith.cmpi sle, %5, %4 : vector<16x16xi32>
    %30 = arith.andi %28, %29 : vector<16x16xi1>
    %31 = arith.extui %30 : vector<16x16xi1> to vector<16x16xi32>
    %32 = arith.sitofp %31 : vector<16x16xi32> to vector<16x16xf32>
    %c0_8 = arith.constant 0 : index
    %c0_9 = arith.constant 0 : index
    %c0_10 = arith.constant 0 : index
    %33 = vector.load %arg3[%c0_8, %c0_9, %c0_10] : memref<1x1x32xf32, #tpu.memory_space<vmem>>, vector<1x1x32xf32>
    %34 = vector.shape_cast %33 : vector<1x1x32xf32> to vector<1x32xf32>
    %c0_11 = arith.constant 0 : index
    %c0_12 = arith.constant 0 : index
    %c0_13 = arith.constant 0 : index
    %35 = vector.load %arg4[%c0_11, %c0_12, %c0_13] : memref<1x1x32xf32, #tpu.memory_space<vmem>>, vector<1x1x32xf32>
    %36 = vector.shape_cast %35 : vector<1x1x32xf32> to vector<1x32xf32>
    %cst = arith.constant dense<0.000000e+00> : vector<16xf32>
    %37 = vector.multi_reduction <add>, %3, %cst [1] : vector<16x32xf32> to vector<16xf32>
    %38 = vector.shape_cast %37 : vector<16xf32> to vector<16x1xf32>
    %cst_14 = arith.constant 3.200000e+01 : f32
    %39 = vector.broadcast %cst_14 : f32 to vector<16x1xf32>
    %40 = arith.divf %38, %39 : vector<16x1xf32>
    %41 = vector.broadcast %40 : vector<16x1xf32> to vector<16x32xf32>
    %42 = arith.subf %3, %41 : vector<16x32xf32>
    %43 = arith.mulf %42, %42 : vector<16x32xf32>
    %cst_15 = arith.constant dense<0.000000e+00> : vector<16xf32>
    %44 = vector.multi_reduction <add>, %43, %cst_15 [1] : vector<16x32xf32> to vector<16xf32>
    %45 = vector.shape_cast %44 : vector<16xf32> to vector<16x1xf32>
    %cst_16 = arith.constant 3.200000e+01 : f32
    %46 = vector.broadcast %cst_16 : f32 to vector<16x1xf32>
    %47 = arith.divf %45, %46 : vector<16x1xf32>
    %48 = vector.broadcast %40 : vector<16x1xf32> to vector<16x32xf32>
    %49 = arith.subf %3, %48 : vector<16x32xf32>
    %cst_17 = arith.constant 9.99999974E-6 : f32
    %50 = vector.broadcast %cst_17 : f32 to vector<16x1xf32>
    %51 = arith.addf %47, %50 : vector<16x1xf32>
    %52 = math.rsqrt %51 : vector<16x1xf32>
    %53 = vector.broadcast %52 : vector<16x1xf32> to vector<16x32xf32>
    %54 = arith.mulf %49, %53 : vector<16x32xf32>
    %55 = vector.broadcast %34 : vector<1x32xf32> to vector<16x32xf32>
    %56 = arith.mulf %54, %55 : vector<16x32xf32>
    %57 = vector.broadcast %36 : vector<1x32xf32> to vector<16x32xf32>
    %58 = arith.addf %56, %57 : vector<16x32xf32>
    %59 = arith.truncf %58 : vector<16x32xf32> to vector<16x32xbf16>
    %c0_18 = arith.constant 0 : index
    %c0_19 = arith.constant 0 : index
    %c0_20 = arith.constant 0 : index
    %60 = vector.load %arg5[%c0_18, %c0_19, %c0_20] : memref<1x32x96xbf16, #tpu.memory_space<vmem>>, vector<1x32x96xbf16>
    %61 = vector.shape_cast %60 : vector<1x32x96xbf16> to vector<32x96xbf16>
    %cst_21 = arith.constant dense<0.000000e+00> : vector<16x96xf32>
    %62 = tpu.matmul %59, %61, %cst_21 {dimension_numbers = #tpu.dot_dimension_numbers<[1], [0], [0], [1], [0, 0, 1, 1], [], []>} : vector<16x32xbf16>, vector<32x96xbf16>, vector<16x96xf32> -> vector<16x96xf32>
    %c0_22 = arith.constant 0 : index
    %c0_23 = arith.constant 0 : index
    %c0_24 = arith.constant 0 : index
    %63 = vector.load %arg6[%c0_22, %c0_23, %c0_24] : memref<1x1x96xf32, #tpu.memory_space<vmem>>, vector<1x1x96xf32>
    %64 = vector.shape_cast %63 : vector<1x1x96xf32> to vector<1x96xf32>
    %65 = vector.broadcast %64 : vector<1x96xf32> to vector<16x96xf32>
    %66 = arith.addf %62, %65 : vector<16x96xf32>
    %67 = vector.extract_strided_slice %66 {offsets = [0, 0], sizes = [16, 32], strides = [1, 1]} : vector<16x96xf32> to vector<16x32xf32>
    %68 = arith.truncf %67 : vector<16x32xf32> to vector<16x32xbf16>
    %69 = vector.extract_strided_slice %66 {offsets = [0, 32], sizes = [16, 32], strides = [1, 1]} : vector<16x96xf32> to vector<16x32xf32>
    %70 = arith.truncf %69 : vector<16x32xf32> to vector<16x32xbf16>
    %71 = vector.extract_strided_slice %66 {offsets = [0, 64], sizes = [16, 32], strides = [1, 1]} : vector<16x96xf32> to vector<16x32xf32>
    %72 = arith.truncf %71 : vector<16x32xf32> to vector<16x32xbf16>
    %73 = vector.extract_strided_slice %68 {offsets = [0, 0], sizes = [16, 8], strides = [1, 1]} : vector<16x32xbf16> to vector<16x8xbf16>
    %74 = vector.extract_strided_slice %70 {offsets = [0, 0], sizes = [16, 8], strides = [1, 1]} : vector<16x32xbf16> to vector<16x8xbf16>
    %75 = vector.extract_strided_slice %72 {offsets = [0, 0], sizes = [16, 8], strides = [1, 1]} : vector<16x32xbf16> to vector<16x8xbf16>
    "tpu.trace_start"() <{level = 10 : i32, message = "qe,ke->qk"}> : () -> ()
    %cst_25 = arith.constant dense<0.000000e+00> : vector<16x16xf32>
    %76 = tpu.matmul %73, %74, %cst_25 {dimension_numbers = #tpu.dot_dimension_numbers<[1], [1], [0], [0], [0, 0, 1, 0], [], []>} : vector<16x8xbf16>, vector<16x8xbf16>, vector<16x16xf32> -> vector<16x16xf32>
    "tpu.trace_stop"() : () -> ()
    %77 = math.exp %76 : vector<16x16xf32>
    %78 = arith.mulf %77, %32 : vector<16x16xf32>
    %cst_26 = arith.constant dense<0.000000e+00> : vector<16xf32>
    %79 = vector.multi_reduction <add>, %78, %cst_26 [1] : vector<16x16xf32> to vector<16xf32>
    %80 = vector.shape_cast %79 : vector<16xf32> to vector<16x1xf32>
    %81 = tpu.reciprocal %80 : vector<16x1xf32> -> vector<16x1xf32>
    %82 = vector.broadcast %81 : vector<16x1xf32> to vector<16x16xf32>
    %83 = arith.mulf %78, %82 : vector<16x16xf32>
    %84 = arith.truncf %83 : vector<16x16xf32> to vector<16x16xbf16>
    "tpu.trace_start"() <{level = 10 : i32, message = "qk,ke->qe"}> : () -> ()
    %cst_27 = arith.constant dense<0.000000e+00> : vector<16x8xf32>
    %85 = tpu.matmul %84, %75, %cst_27 {dimension_numbers = #tpu.dot_dimension_numbers<[1], [0], [0], [1], [0, 0, 1, 1], [], []>} : vector<16x16xbf16>, vector<16x8xbf16>, vector<16x8xf32> -> vector<16x8xf32>
    "tpu.trace_stop"() : () -> ()
    %86 = vector.extract_strided_slice %68 {offsets = [0, 8], sizes = [16, 8], strides = [1, 1]} : vector<16x32xbf16> to vector<16x8xbf16>
    %87 = vector.extract_strided_slice %70 {offsets = [0, 8], sizes = [16, 8], strides = [1, 1]} : vector<16x32xbf16> to vector<16x8xbf16>
    %88 = vector.extract_strided_slice %72 {offsets = [0, 8], sizes = [16, 8], strides = [1, 1]} : vector<16x32xbf16> to vector<16x8xbf16>
    "tpu.trace_start"() <{level = 10 : i32, message = "qe,ke->qk"}> : () -> ()
    %cst_28 = arith.constant dense<0.000000e+00> : vector<16x16xf32>
    %89 = tpu.matmul %86, %87, %cst_28 {dimension_numbers = #tpu.dot_dimension_numbers<[1], [1], [0], [0], [0, 0, 1, 0], [], []>} : vector<16x8xbf16>, vector<16x8xbf16>, vector<16x16xf32> -> vector<16x16xf32>
    "tpu.trace_stop"() : () -> ()
    %90 = math.exp %89 : vector<16x16xf32>
    %91 = arith.mulf %90, %32 : vector<16x16xf32>
    %cst_29 = arith.constant dense<0.000000e+00> : vector<16xf32>
    %92 = vector.multi_reduction <add>, %91, %cst_29 [1] : vector<16x16xf32> to vector<16xf32>
    %93 = vector.shape_cast %92 : vector<16xf32> to vector<16x1xf32>
    %94 = tpu.reciprocal %93 : vector<16x1xf32> -> vector<16x1xf32>
    %95 = vector.broadcast %94 : vector<16x1xf32> to vector<16x16xf32>
    %96 = arith.mulf %91, %95 : vector<16x16xf32>
    %97 = arith.truncf %96 : vector<16x16xf32> to vector<16x16xbf16>
    "tpu.trace_start"() <{level = 10 : i32, message = "qk,ke->qe"}> : () -> ()
    %cst_30 = arith.constant dense<0.000000e+00> : vector<16x8xf32>
    %98 = tpu.matmul %97, %88, %cst_30 {dimension_numbers = #tpu.dot_dimension_numbers<[1], [0], [0], [1], [0, 0, 1, 1], [], []>} : vector<16x16xbf16>, vector<16x8xbf16>, vector<16x8xf32> -> vector<16x8xf32>
    "tpu.trace_stop"() : () -> ()
    %99 = vector.extract_strided_slice %68 {offsets = [0, 16], sizes = [16, 8], strides = [1, 1]} : vector<16x32xbf16> to vector<16x8xbf16>
    %100 = vector.extract_strided_slice %70 {offsets = [0, 16], sizes = [16, 8], strides = [1, 1]} : vector<16x32xbf16> to vector<16x8xbf16>
    %101 = vector.extract_strided_slice %72 {offsets = [0, 16], sizes = [16, 8], strides = [1, 1]} : vector<16x32xbf16> to vector<16x8xbf16>
    "tpu.trace_start"() <{level = 10 : i32, message = "qe,ke->qk"}> : () -> ()
    %cst_31 = arith.constant dense<0.000000e+00> : vector<16x16xf32>
    %102 = tpu.matmul %99, %100, %cst_31 {dimension_numbers = #tpu.dot_dimension_numbers<[1], [1], [0], [0], [0, 0, 1, 0], [], []>} : vector<16x8xbf16>, vector<16x8xbf16>, vector<16x16xf32> -> vector<16x16xf32>
    "tpu.trace_stop"() : () -> ()
    %103 = math.exp %102 : vector<16x16xf32>
    %104 = arith.mulf %103, %32 : vector<16x16xf32>
    %cst_32 = arith.constant dense<0.000000e+00> : vector<16xf32>
    %105 = vector.multi_reduction <add>, %104, %cst_32 [1] : vector<16x16xf32> to vector<16xf32>
    %106 = vector.shape_cast %105 : vector<16xf32> to vector<16x1xf32>
    %107 = tpu.reciprocal %106 : vector<16x1xf32> -> vector<16x1xf32>
    %108 = vector.broadcast %107 : vector<16x1xf32> to vector<16x16xf32>
    %109 = arith.mulf %104, %108 : vector<16x16xf32>
    %110 = arith.truncf %109 : vector<16x16xf32> to vector<16x16xbf16>
    "tpu.trace_start"() <{level = 10 : i32, message = "qk,ke->qe"}> : () -> ()
    %cst_33 = arith.constant dense<0.000000e+00> : vector<16x8xf32>
    %111 = tpu.matmul %110, %101, %cst_33 {dimension_numbers = #tpu.dot_dimension_numbers<[1], [0], [0], [1], [0, 0, 1, 1], [], []>} : vector<16x16xbf16>, vector<16x8xbf16>, vector<16x8xf32> -> vector<16x8xf32>
    "tpu.trace_stop"() : () -> ()
    %112 = vector.extract_strided_slice %68 {offsets = [0, 24], sizes = [16, 8], strides = [1, 1]} : vector<16x32xbf16> to vector<16x8xbf16>
    %113 = vector.extract_strided_slice %70 {offsets = [0, 24], sizes = [16, 8], strides = [1, 1]} : vector<16x32xbf16> to vector<16x8xbf16>
    %114 = vector.extract_strided_slice %72 {offsets = [0, 24], sizes = [16, 8], strides = [1, 1]} : vector<16x32xbf16> to vector<16x8xbf16>
    "tpu.trace_start"() <{level = 10 : i32, message = "qe,ke->qk"}> : () -> ()
    %cst_34 = arith.constant dense<0.000000e+00> : vector<16x16xf32>
    %115 = tpu.matmul %112, %113, %cst_34 {dimension_numbers = #tpu.dot_dimension_numbers<[1], [1], [0], [0], [0, 0, 1, 0], [], []>} : vector<16x8xbf16>, vector<16x8xbf16>, vector<16x16xf32> -> vector<16x16xf32>
    "tpu.trace_stop"() : () -> ()
    %116 = math.exp %115 : vector<16x16xf32>
    %117 = arith.mulf %116, %32 : vector<16x16xf32>
    %cst_35 = arith.constant dense<0.000000e+00> : vector<16xf32>
    %118 = vector.multi_reduction <add>, %117, %cst_35 [1] : vector<16x16xf32> to vector<16xf32>
    %119 = vector.shape_cast %118 : vector<16xf32> to vector<16x1xf32>
    %120 = tpu.reciprocal %119 : vector<16x1xf32> -> vector<16x1xf32>
    %121 = vector.broadcast %120 : vector<16x1xf32> to vector<16x16xf32>
    %122 = arith.mulf %117, %121 : vector<16x16xf32>
    %123 = arith.truncf %122 : vector<16x16xf32> to vector<16x16xbf16>
    "tpu.trace_start"() <{level = 10 : i32, message = "qk,ke->qe"}> : () -> ()
    %cst_36 = arith.constant dense<0.000000e+00> : vector<16x8xf32>
    %124 = tpu.matmul %123, %114, %cst_36 {dimension_numbers = #tpu.dot_dimension_numbers<[1], [0], [0], [1], [0, 0, 1, 1], [], []>} : vector<16x16xbf16>, vector<16x8xbf16>, vector<16x8xf32> -> vector<16x8xf32>
    "tpu.trace_stop"() : () -> ()
    %125 = tpu.concatenate %85, %98, %111, %124 in 1 : vector<16x8xf32>, vector<16x8xf32>, vector<16x8xf32>, vector<16x8xf32> -> vector<16x32xf32>
    %126 = arith.truncf %125 : vector<16x32xf32> to vector<16x32xbf16>
    %c0_37 = arith.constant 0 : index
    %c0_38 = arith.constant 0 : index
    %c0_39 = arith.constant 0 : index
    %127 = vector.load %arg7[%c0_37, %c0_38, %c0_39] : memref<1x32x32xbf16, #tpu.memory_space<vmem>>, vector<1x32x32xbf16>
    %128 = vector.shape_cast %127 : vector<1x32x32xbf16> to vector<32x32xbf16>
    %cst_40 = arith.constant dense<0.000000e+00> : vector<16x32xf32>
    %129 = tpu.matmul %126, %128, %cst_40 {dimension_numbers = #tpu.dot_dimension_numbers<[1], [0], [0], [1], [0, 0, 1, 1], [], []>} : vector<16x32xbf16>, vector<32x32xbf16>, vector<16x32xf32> -> vector<16x32xf32>
    %130 = arith.addf %3, %129 : vector<16x32xf32>
    %c0_41 = arith.constant 0 : index
    %c0_42 = arith.constant 0 : index
    %c0_43 = arith.constant 0 : index
    %131 = vector.load %arg8[%c0_41, %c0_42, %c0_43] : memref<1x1x32xf32, #tpu.memory_space<vmem>>, vector<1x1x32xf32>
    %132 = vector.shape_cast %131 : vector<1x1x32xf32> to vector<1x32xf32>
    %133 = vector.broadcast %132 : vector<1x32xf32> to vector<16x32xf32>
    %134 = arith.addf %130, %133 : vector<16x32xf32>
    %c0_44 = arith.constant 0 : index
    %c0_45 = arith.constant 0 : index
    %c0_46 = arith.constant 0 : index
    %135 = vector.load %arg9[%c0_44, %c0_45, %c0_46] : memref<1x1x32xf32, #tpu.memory_space<vmem>>, vector<1x1x32xf32>
    %136 = vector.shape_cast %135 : vector<1x1x32xf32> to vector<1x32xf32>
    %c0_47 = arith.constant 0 : index
    %c0_48 = arith.constant 0 : index
    %c0_49 = arith.constant 0 : index
    %137 = vector.load %arg10[%c0_47, %c0_48, %c0_49] : memref<1x1x32xf32, #tpu.memory_space<vmem>>, vector<1x1x32xf32>
    %138 = vector.shape_cast %137 : vector<1x1x32xf32> to vector<1x32xf32>
    %cst_50 = arith.constant dense<0.000000e+00> : vector<16xf32>
    %139 = vector.multi_reduction <add>, %134, %cst_50 [1] : vector<16x32xf32> to vector<16xf32>
    %140 = vector.shape_cast %139 : vector<16xf32> to vector<16x1xf32>
    %cst_51 = arith.constant 3.200000e+01 : f32
    %141 = vector.broadcast %cst_51 : f32 to vector<16x1xf32>
    %142 = arith.divf %140, %141 : vector<16x1xf32>
    %143 = vector.broadcast %142 : vector<16x1xf32> to vector<16x32xf32>
    %144 = arith.subf %134, %143 : vector<16x32xf32>
    %145 = arith.mulf %144, %144 : vector<16x32xf32>
    %cst_52 = arith.constant dense<0.000000e+00> : vector<16xf32>
    %146 = vector.multi_reduction <add>, %145, %cst_52 [1] : vector<16x32xf32> to vector<16xf32>
    %147 = vector.shape_cast %146 : vector<16xf32> to vector<16x1xf32>
    %cst_53 = arith.constant 3.200000e+01 : f32
    %148 = vector.broadcast %cst_53 : f32 to vector<16x1xf32>
    %149 = arith.divf %147, %148 : vector<16x1xf32>
    %150 = vector.broadcast %142 : vector<16x1xf32> to vector<16x32xf32>
    %151 = arith.subf %134, %150 : vector<16x32xf32>
    %cst_54 = arith.constant 9.99999974E-6 : f32
    %152 = vector.broadcast %cst_54 : f32 to vector<16x1xf32>
    %153 = arith.addf %149, %152 : vector<16x1xf32>
    %154 = math.rsqrt %153 : vector<16x1xf32>
    %155 = vector.broadcast %154 : vector<16x1xf32> to vector<16x32xf32>
    %156 = arith.mulf %151, %155 : vector<16x32xf32>
    %157 = vector.broadcast %136 : vector<1x32xf32> to vector<16x32xf32>
    %158 = arith.mulf %156, %157 : vector<16x32xf32>
    %159 = vector.broadcast %138 : vector<1x32xf32> to vector<16x32xf32>
    %160 = arith.addf %158, %159 : vector<16x32xf32>
    %161 = arith.truncf %160 : vector<16x32xf32> to vector<16x32xbf16>
    %c0_55 = arith.constant 0 : index
    %c0_56 = arith.constant 0 : index
    %c0_57 = arith.constant 0 : index
    %162 = vector.load %arg11[%c0_55, %c0_56, %c0_57] : memref<1x32x128xbf16, #tpu.memory_space<vmem>>, vector<1x32x128xbf16>
    %163 = vector.shape_cast %162 : vector<1x32x128xbf16> to vector<32x128xbf16>
    %cst_58 = arith.constant dense<0.000000e+00> : vector<16x128xf32>
    %164 = tpu.matmul %161, %163, %cst_58 {dimension_numbers = #tpu.dot_dimension_numbers<[1], [0], [0], [1], [0, 0, 1, 1], [], []>} : vector<16x32xbf16>, vector<32x128xbf16>, vector<16x128xf32> -> vector<16x128xf32>
    %c0_59 = arith.constant 0 : index
    %c0_60 = arith.constant 0 : index
    %c0_61 = arith.constant 0 : index
    %165 = vector.load %arg12[%c0_59, %c0_60, %c0_61] : memref<1x1x128xf32, #tpu.memory_space<vmem>>, vector<1x1x128xf32>
    %166 = vector.shape_cast %165 : vector<1x1x128xf32> to vector<1x128xf32>
    %167 = vector.broadcast %166 : vector<1x128xf32> to vector<16x128xf32>
    %168 = arith.addf %164, %167 : vector<16x128xf32>
    %cst_62 = arith.constant 1.702000e+00 : f32
    %169 = vector.broadcast %cst_62 : f32 to vector<16x128xf32>
    %170 = arith.mulf %169, %168 : vector<16x128xf32>
    %171 = arith.negf %170 : vector<16x128xf32>
    %172 = math.exp %171 : vector<16x128xf32>
    %cst_63 = arith.constant 1.000000e+00 : f32
    %173 = vector.broadcast %cst_63 : f32 to vector<16x128xf32>
    %174 = arith.addf %173, %172 : vector<16x128xf32>
    %175 = arith.divf %173, %174 : vector<16x128xf32>
    %176 = arith.mulf %168, %175 : vector<16x128xf32>
    %177 = arith.truncf %176 : vector<16x128xf32> to vector<16x128xbf16>
    %c0_64 = arith.constant 0 : index
    %c0_65 = arith.constant 0 : index
    %c0_66 = arith.constant 0 : index
    %178 = vector.load %arg13[%c0_64, %c0_65, %c0_66] : memref<1x128x32xbf16, #tpu.memory_space<vmem>>, vector<1x128x32xbf16>
    %179 = vector.shape_cast %178 : vector<1x128x32xbf16> to vector<128x32xbf16>
    %cst_67 = arith.constant dense<0.000000e+00> : vector<16x32xf32>
    %180 = tpu.matmul %177, %179, %cst_67 {dimension_numbers = #tpu.dot_dimension_numbers<[1], [0], [0], [1], [0, 0, 1, 1], [], []>} : vector<16x128xbf16>, vector<128x32xbf16>, vector<16x32xf32> -> vector<16x32xf32>
    %181 = arith.addf %134, %180 : vector<16x32xf32>
    %c0_68 = arith.constant 0 : index
    %c0_69 = arith.constant 0 : index
    %c0_70 = arith.constant 0 : index
    %182 = vector.load %arg14[%c0_68, %c0_69, %c0_70] : memref<1x1x32xf32, #tpu.memory_space<vmem>>, vector<1x1x32xf32>
    %183 = vector.shape_cast %182 : vector<1x1x32xf32> to vector<1x32xf32>
    %184 = vector.broadcast %183 : vector<1x32xf32> to vector<16x32xf32>
    %185 = arith.addf %181, %184 : vector<16x32xf32>
    %c0_71 = arith.constant 0 : index
    %c0_72 = arith.constant 0 : index
    %186 = vector.load %arg19[%c0_71, %c0_72] : memref<16x32xf32, #tpu.memory_space<vmem>>, vector<16x32xf32>
    tpu.vector_store %arg19[%c0_71, %c0_72], %185 {strides = array<i32>} : memref<16x32xf32, #tpu.memory_space<vmem>>, vector<16x32xf32>,
    %c1_i32 = arith.constant 1 : i32
    %187 = arith.cmpi eq, %arg0, %c1_i32 : i32
    %188 = arith.extui %187 : i1 to i32
    %c0_i32_73 = arith.constant 0 : i32
    %189 = arith.cmpi ne, %188, %c0_i32_73 : i32
    scf.if %189 {
      %c0_74 = arith.constant 0 : index
      %190 = memref.load %arg1[%c0_74] : memref<2xi32, #tpu.memory_space<smem>>
      %c0_i32_75 = arith.constant 0 : i32
      %191 = arith.addi %190, %c0_i32_75 : i32
      %192 = tpu.iota {dimensions = array<i32: 1>} : vector<1x16xi32>
      %193 = vector.broadcast %191 : i32 to vector<1x16xi32>
      %194 = arith.cmpi eq, %192, %193 : vector<1x16xi32>
      %195 = arith.extui %194 : vector<1x16xi1> to vector<1x16xi32>
      %196 = arith.sitofp %195 : vector<1x16xi32> to vector<1x16xf32>
      %c1 = arith.constant 1 : index
      %197 = memref.load %arg1[%c1] : memref<2xi32, #tpu.memory_space<smem>>
      %c8_i32_76 = arith.constant 8 : i32
      %198 = arith.addi %197, %c8_i32_76 : i32
      %199 = tpu.iota {dimensions = array<i32: 1>} : vector<1x16xi32>
      %200 = vector.broadcast %198 : i32 to vector<1x16xi32>
      %201 = arith.cmpi eq, %199, %200 : vector<1x16xi32>
      %202 = arith.extui %201 : vector<1x16xi1> to vector<1x16xi32>
      %203 = arith.sitofp %202 : vector<1x16xi32> to vector<1x16xf32>
      %204 = tpu.concatenate %196, %203 in 0 : vector<1x16xf32>, vector<1x16xf32> -> vector<2x16xf32>
      %cst_77 = arith.constant dense<0.000000e+00> : vector<2x32xf32>
      %205 = tpu.matmul %204, %185, %cst_77 {dimension_numbers = #tpu.dot_dimension_numbers<[1], [0], [0], [1], [0, 0, 1, 1], [], []>} : vector<2x16xf32>, vector<16x32xf32>, vector<2x32xf32> -> vector<2x32xf32>
      %c0_78 = arith.constant 0 : index
      %c0_79 = arith.constant 0 : index
      %206 = vector.load %arg15[%c0_78, %c0_79] : memref<1x32xf32, #tpu.memory_space<vmem>>, vector<1x32xf32>
      %c0_80 = arith.constant 0 : index
      %c0_81 = arith.constant 0 : index
      %207 = vector.load %arg16[%c0_80, %c0_81] : memref<1x32xf32, #tpu.memory_space<vmem>>, vector<1x32xf32>
      %cst_82 = arith.constant dense<0.000000e+00> : vector<2xf32>
      %208 = vector.multi_reduction <add>, %205, %cst_82 [1] : vector<2x32xf32> to vector<2xf32>
      %209 = vector.shape_cast %208 : vector<2xf32> to vector<2x1xf32>
      %cst_83 = arith.constant 3.200000e+01 : f32
      %210 = vector.broadcast %cst_83 : f32 to vector<2x1xf32>
      %211 = arith.divf %209, %210 : vector<2x1xf32>
      %212 = vector.broadcast %211 : vector<2x1xf32> to vector<2x32xf32>
      %213 = arith.subf %205, %212 : vector<2x32xf32>
      %214 = arith.mulf %213, %213 : vector<2x32xf32>
      %cst_84 = arith.constant dense<0.000000e+00> : vector<2xf32>
      %215 = vector.multi_reduction <add>, %214, %cst_84 [1] : vector<2x32xf32> to vector<2xf32>
      %216 = vector.shape_cast %215 : vector<2xf32> to vector<2x1xf32>
      %cst_85 = arith.constant 3.200000e+01 : f32
      %217 = vector.broadcast %cst_85 : f32 to vector<2x1xf32>
      %218 = arith.divf %216, %217 : vector<2x1xf32>
      %219 = vector.broadcast %211 : vector<2x1xf32> to vector<2x32xf32>
      %220 = arith.subf %205, %219 : vector<2x32xf32>
      %cst_86 = arith.constant 9.99999974E-6 : f32
      %221 = vector.broadcast %cst_86 : f32 to vector<2x1xf32>
      %222 = arith.addf %218, %221 : vector<2x1xf32>
      %223 = math.rsqrt %222 : vector<2x1xf32>
      %224 = vector.broadcast %223 : vector<2x1xf32> to vector<2x32xf32>
      %225 = arith.mulf %220, %224 : vector<2x32xf32>
      %226 = vector.broadcast %206 : vector<1x32xf32> to vector<2x32xf32>
      %227 = arith.mulf %225, %226 : vector<2x32xf32>
      %228 = vector.broadcast %207 : vector<1x32xf32> to vector<2x32xf32>
      %229 = arith.addf %227, %228 : vector<2x32xf32>
      %c0_87 = arith.constant 0 : index
      %c0_88 = arith.constant 0 : index
      %230 = vector.load %arg17[%c0_87, %c0_88] : memref<32x16xf32, #tpu.memory_space<vmem>>, vector<32x16xf32>
      %cst_89 = arith.constant dense<0.000000e+00> : vector<2x16xf32>
      %231 = tpu.matmul %229, %230, %cst_89 {dimension_numbers = #tpu.dot_dimension_numbers<[1], [0], [0], [1], [0, 0, 1, 1], [], []>} : vector<2x32xf32>, vector<32x16xf32>, vector<2x16xf32> -> vector<2x16xf32>
      %c0_90 = arith.constant 0 : index
      %c0_91 = arith.constant 0 : index
      %232 = vector.load %arg18[%c0_90, %c0_91] : memref<2x16xf32, #tpu.memory_space<vmem>>, vector<2x16xf32>
      tpu.vector_store %arg18[%c0_90, %c0_91], %231 {strides = array<i32>} : memref<2x16xf32, #tpu.memory_space<vmem>>, vector<2x16xf32>,
    } else {
    }
    return
  }
  func.func @transform_0(%arg0: i32, %arg1: memref<2xi32, #tpu.memory_space<smem>>) -> (i32, i32) {
    %c0_i32 = arith.constant 0 : i32
    %c0_i32_0 = arith.constant 0 : i32
    %c0_i32_1 = arith.constant 0 : i32
    return %c0_i32, %c0_i32_0 : i32, i32
  }
  func.func @transform_1(%arg0: i32, %arg1: memref<2xi32, #tpu.memory_space<smem>>) -> (i32, i32, i32) {
    %c0_i32 = arith.constant 0 : i32
    %c0_i32_0 = arith.constant 0 : i32
    %c0_i32_1 = arith.constant 0 : i32
    return %arg0, %c0_i32, %c0_i32_0 : i32, i32, i32
  }
  func.func @transform_2(%arg0: i32, %arg1: memref<2xi32, #tpu.memory_space<smem>>) -> (i32, i32, i32) {
    %c0_i32 = arith.constant 0 : i32
    %c0_i32_0 = arith.constant 0 : i32
    %c0_i32_1 = arith.constant 0 : i32
    return %arg0, %c0_i32, %c0_i32_0 : i32, i32, i32
  }
  func.func @transform_3(%arg0: i32, %arg1: memref<2xi32, #tpu.memory_space<smem>>) -> (i32, i32, i32) {
    %c0_i32 = arith.constant 0 : i32
    %c0_i32_0 = arith.constant 0 : i32
    %c0_i32_1 = arith.constant 0 : i32
    return %arg0, %c0_i32, %c0_i32_0 : i32, i32, i32
  }
  func.func @transform_4(%arg0: i32, %arg1: memref<2xi32, #tpu.memory_space<smem>>) -> (i32, i32, i32) {
    %c0_i32 = arith.constant 0 : i32
    %c0_i32_0 = arith.constant 0 : i32
    %c0_i32_1 = arith.constant 0 : i32
    return %arg0, %c0_i32, %c0_i32_0 : i32, i32, i32
  }
  func.func @transform_5(%arg0: i32, %arg1: memref<2xi32, #tpu.memory_space<smem>>) -> (i32, i32, i32) {
    %c0_i32 = arith.constant 0 : i32
    %c0_i32_0 = arith.constant 0 : i32
    %c0_i32_1 = arith.constant 0 : i32
    return %arg0, %c0_i32, %c0_i32_0 : i32, i32, i32
  }
  func.func @transform_6(%arg0: i32, %arg1: memref<2xi32, #tpu.memory_space<smem>>) -> (i32, i32, i32) {
    %c0_i32 = arith.constant 0 : i32
    %c0_i32_0 = arith.constant 0 : i32
    %c0_i32_1 = arith.constant 0 : i32
    return %arg0, %c0_i32, %c0_i32_0 : i32, i32, i32
  }
  func.func @transform_7(%arg0: i32, %arg1: memref<2xi32, #tpu.memory_space<smem>>) -> (i32, i32, i32) {
    %c0_i32 = arith.constant 0 : i32
    %c0_i32_0 = arith.constant 0 : i32
    %c0_i32_1 = arith.constant 0 : i32
    return %arg0, %c0_i32, %c0_i32_0 : i32, i32, i32
  }
  func.func @transform_8(%arg0: i32, %arg1: memref<2xi32, #tpu.memory_space<smem>>) -> (i32, i32, i32) {
    %c0_i32 = arith.constant 0 : i32
    %c0_i32_0 = arith.constant 0 : i32
    %c0_i32_1 = arith.constant 0 : i32
    return %arg0, %c0_i32, %c0_i32_0 : i32, i32, i32
  }
  func.func @transform_9(%arg0: i32, %arg1: memref<2xi32, #tpu.memory_space<smem>>) -> (i32, i32, i32) {
    %c0_i32 = arith.constant 0 : i32
    %c0_i32_0 = arith.constant 0 : i32
    %c0_i32_1 = arith.constant 0 : i32
    return %arg0, %c0_i32, %c0_i32_0 : i32, i32, i32
  }
  func.func @transform_10(%arg0: i32, %arg1: memref<2xi32, #tpu.memory_space<smem>>) -> (i32, i32, i32) {
    %c0_i32 = arith.constant 0 : i32
    %c0_i32_0 = arith.constant 0 : i32
    %c0_i32_1 = arith.constant 0 : i32
    return %arg0, %c0_i32, %c0_i32_0 : i32, i32, i32
  }
  func.func @transform_11(%arg0: i32, %arg1: memref<2xi32, #tpu.memory_space<smem>>) -> (i32, i32, i32) {
    %c0_i32 = arith.constant 0 : i32
    %c0_i32_0 = arith.constant 0 : i32
    %c0_i32_1 = arith.constant 0 : i32
    return %arg0, %c0_i32, %c0_i32_0 : i32, i32, i32
  }
  func.func @transform_12(%arg0: i32, %arg1: memref<2xi32, #tpu.memory_space<smem>>) -> (i32, i32, i32) {
    %c0_i32 = arith.constant 0 : i32
    %c0_i32_0 = arith.constant 0 : i32
    %c0_i32_1 = arith.constant 0 : i32
    return %arg0, %c0_i32, %c0_i32_0 : i32, i32, i32
  }
  func.func @transform_13(%arg0: i32, %arg1: memref<2xi32, #tpu.memory_space<smem>>) -> (i32, i32) {
    %c0_i32 = arith.constant 0 : i32
    %c0_i32_0 = arith.constant 0 : i32
    %c0_i32_1 = arith.constant 0 : i32
    return %c0_i32, %c0_i32_0 : i32, i32
  }
  func.func @transform_14(%arg0: i32, %arg1: memref<2xi32, #tpu.memory_space<smem>>) -> (i32, i32) {
    %c0_i32 = arith.constant 0 : i32
    %c0_i32_0 = arith.constant 0 : i32
    %c0_i32_1 = arith.constant 0 : i32
    return %c0_i32, %c0_i32_0 : i32, i32
  }
  func.func @transform_15(%arg0: i32, %arg1: memref<2xi32, #tpu.memory_space<smem>>) -> (i32, i32) {
    %c0_i32 = arith.constant 0 : i32
    %c0_i32_0 = arith.constant 0 : i32
    %c0_i32_1 = arith.constant 0 : i32
    return %c0_i32, %c0_i32_0 : i32, i32
  }
  func.func @transform_16(%arg0: i32, %arg1: memref<2xi32, #tpu.memory_space<smem>>) -> (i32, i32) {
    %c0_i32 = arith.constant 0 : i32
    %c0_i32_0 = arith.constant 0 : i32
    %c0_i32_1 = arith.constant 0 : i32
    return %c0_i32, %c0_i32_0 : i32, i32
  }
}

</mosaic_0001>

<llo_original>
// kernel: tpu_custom_call.1
$region0: #{tpu_custom_call.1}
  #allocation0 [shape = 'u32[]', space=smem, size = 0x4, offset = 0x4, fixed_abs, tag = 'smem constant byte address 0x4 - core index']
  #allocation1 [shape = 'u32[144,128]{1,0:T(1,128)}', space=vmem, size = 0x12000, scoped, tag = 'internal scratch']
  #allocation2 [shape = 'f32[16,32]{1,0:T(8,128)}', space=vmem, size = 0x2000, scoped, tag = 'scratch operand']
  #allocation3 [shape = 's32[1]{0}', space=sflag, size = 0x4, scoped, tag = 'scoped memory for tpu_custom_call.1']
  #allocation4 [shape = 'u8[512]{0}', space=smem, size = 0x200, scoped, tag = 'prefetched SMEM operand 0']
  %s0 = inlined_call_operand.vmem [shape: s32[2], index: 0, kind: input, shape index: {}]
  %s1 = inlined_call_operand.vmem [shape: f32[16,32], index: 1, kind: input, shape index: {}]
  %s2 = inlined_call_operand.vmem [shape: f32[2,1,32], index: 2, kind: input, shape index: {}]
  %s3 = inlined_call_operand.vmem [shape: f32[2,1,32], index: 3, kind: input, shape index: {}]
  %s4 = inlined_call_operand.vmem [shape: bf16[2,32,96], index: 4, kind: input, shape index: {}]
  %s5 = inlined_call_operand.vmem [shape: f32[2,1,96], index: 5, kind: input, shape index: {}]
  %s6 = inlined_call_operand.vmem [shape: bf16[2,32,32], index: 6, kind: input, shape index: {}]
  %s7 = inlined_call_operand.vmem [shape: f32[2,1,32], index: 7, kind: input, shape index: {}]
  %s8 = inlined_call_operand.vmem [shape: f32[2,1,32], index: 8, kind: input, shape index: {}]
  %s9 = inlined_call_operand.vmem [shape: f32[2,1,32], index: 9, kind: input, shape index: {}]
  %s10 = inlined_call_operand.vmem [shape: bf16[2,32,128], index: 10, kind: input, shape index: {}]
  %s11 = inlined_call_operand.vmem [shape: f32[2,1,128], index: 11, kind: input, shape index: {}]
  %s12 = inlined_call_operand.vmem [shape: bf16[2,128,32], index: 12, kind: input, shape index: {}]
  %s13 = inlined_call_operand.vmem [shape: f32[2,1,32], index: 13, kind: input, shape index: {}]
  %s14 = inlined_call_operand.vmem [shape: f32[1,32], index: 14, kind: input, shape index: {}]
  %s15 = inlined_call_operand.vmem [shape: f32[1,32], index: 15, kind: input, shape index: {}]
  %s16 = inlined_call_operand.vmem [shape: f32[32,16], index: 16, kind: input, shape index: {}]
  %s17 = inlined_call_operand.hbm [shape: f32[2,16], index: 17, kind: output, shape index: {}]
  %s18 = sld [smem:[#allocation0]]
  $region105: #{tpu_custom_call.1} parent=0
    _
  %s20 = ssub.s32 1, %s18
  %s21 = scalar_select 0, %s20, %s18
  %s22 = sshll.u32 %s0, 4
  %s23 = int_to_ptr.vmem [resolvable:$true] %s22
  %25 = dma.vmem_to_smem %s23, 16, [#allocation4], [#allocation3]
  %26 = dma.done [#allocation3], 16
  %27 = sfence
  $region1: #{tpu_custom_call.1} parent=0
    #allocation5 [shape = 'u8[1024]{0}', space=vmem, size = 0x400, scoped, tag = 'output window, operand 0, single buffered']
    #allocation6 [shape = 's32[2]{0}', space=sflag, size = 0x8, scoped, tag = 'scoped memory for tpu_custom_call.1']
    %28 = vsyncpa [#allocation6], 0
    loop: start=0, step=1, limit=4
    $region2: #{tpu_custom_call.1} parent=1 // loop_pre_header
      _
    $region3: #{tpu_custom_call.1} parent=1 // loop_header
      %s30 = sphi 0, %s34
      %p31 = scmp.ge.s32.totalorder %s30, 4
      %s38 = sphi 0, %s38
      %s40 = sphi 0, %s38
      %s41 = sphi 0, %s40
      %s55 = sphi 0, %s41
      %s61 = sphi 0, %s63
      %s64 = sphi 0, %s61
      %s65 = sphi 0, %s64
      %s81 = sphi 0, %s65
      %s87 = sphi 0, %s89
      %s90 = sphi 0, %s87
      %s91 = sphi 0, %s90
      %s107 = sphi 0, %s91
      %s113 = sphi 0, %s115
      %s116 = sphi 0, %s113
      %s117 = sphi 0, %s116
      %s133 = sphi 0, %s117
      %s139 = sphi 0, %s141
      %s142 = sphi 0, %s139
      %s143 = sphi 0, %s142
      %s159 = sphi 0, %s143
      %s165 = sphi 0, %s167
      %s168 = sphi 0, %s165
      %s169 = sphi 0, %s168
      %s185 = sphi 0, %s169
      %s191 = sphi 0, %s193
      %s194 = sphi 0, %s191
      %s195 = sphi 0, %s194
      %s211 = sphi 0, %s195
      %s217 = sphi 0, %s219
      %s220 = sphi 0, %s217
      %s221 = sphi 0, %s220
      %s237 = sphi 0, %s221
      %s243 = sphi 0, %s245
      %s246 = sphi 0, %s243
      %s247 = sphi 0, %s246
      %s263 = sphi 0, %s247
      %s269 = sphi 0, %s271
      %s272 = sphi 0, %s269
      %s273 = sphi 0, %s272
      %s289 = sphi 0, %s273
      %s295 = sphi 0, %s297
      %s298 = sphi 0, %s295
      %s299 = sphi 0, %s298
      %s315 = sphi 0, %s299
      %s321 = sphi 0, %s323
      %s324 = sphi 0, %s321
      %s325 = sphi 0, %s324
      %s341 = sphi 0, %s325
      %s347 = sphi 0, %s349
      %s350 = sphi 0, %s347
      %s351 = sphi 0, %s350
      %s367 = sphi 0, %s351
      %s371 = sphi 0, %s371
      %s373 = sphi 0, %s371
      %s374 = sphi 0, %s373
      %s388 = sphi 0, %s374
      %s392 = sphi 0, %s392
      %s394 = sphi 0, %s392
      %s395 = sphi 0, %s394
      %s409 = sphi 0, %s395
      %s413 = sphi 0, %s413
      %s415 = sphi 0, %s413
      %s416 = sphi 0, %s415
      %s430 = sphi 0, %s416
      %s434 = sphi 0, %s434
      %s436 = sphi 0, %s434
      %s437 = sphi 0, %s436
      %s451 = sphi 0, %s437
    $region4: #{tpu_custom_call.1} parent=1 // loop_header_branch
      %33 = sbr.rel (%p31) target = $region8
    $region5: #{tpu_custom_call.1} parent=1 // loop_body
      %s35 = ssub.s32 %s30, 1
      %s36 = ssub.s32 %s30, 2
      %s37 = sadd.s32 %s30, 1
      %s39 = sadd.s32 %s38, 1
      %p42 = scmp.eq.s32.totalorder %s30, 1
      %p43 = scmp.ne.s32.totalorder %s38, %s40
      %p44 = scmp.eq.s32.totalorder %s30, 0
      %p45 = por %p43, %p44
      %p46 = scmp.ne.s32.totalorder %s38, %s40
      %p47 = scmp.eq.s32.totalorder %s35, 1
      %p48 = por %p46, %p47
      %p49 = scmp.ne.s32.totalorder %s40, %s41
      %p50 = scmp.eq.s32.totalorder %s35, 0
      %p51 = por %p49, %p50
      %p52 = scmp.ne.s32.totalorder %s40, %s41
      %p53 = scmp.eq.s32.totalorder %s36, 1
      %p54 = por %p52, %p53
      %p56 = scmp.ne.s32.totalorder %s41, %s55
      %p57 = scmp.eq.s32.totalorder %s36, 0
      %p58 = por %p56, %p57
      %s59 = ssub.s32 %s30, %s37
      %p60 = scmp.eq.s32.totalorder %s59, 0
      %s62 = sadd.s32 %s61, 1
      %s63 = scalar_select %p60, %s61, %s62
      %p66 = pneg %p60
      %p67 = scmp.eq.s32.totalorder %s30, 1
      %p68 = por %p66, %p67
      %p69 = scmp.ne.s32.totalorder %s61, %s64
      %p70 = scmp.eq.s32.totalorder %s30, 0
      %p71 = por %p69, %p70
      %p72 = scmp.ne.s32.totalorder %s61, %s64
      %p73 = scmp.eq.s32.totalorder %s35, 1
      %p74 = por %p72, %p73
      %p75 = scmp.ne.s32.totalorder %s64, %s65
      %p76 = scmp.eq.s32.totalorder %s35, 0
      %p77 = por %p75, %p76
      %p78 = scmp.ne.s32.totalorder %s64, %s65
      %p79 = scmp.eq.s32.totalorder %s36, 1
      %p80 = por %p78, %p79
      %p82 = scmp.ne.s32.totalorder %s65, %s81
      %p83 = scmp.eq.s32.totalorder %s36, 0
      %p84 = por %p82, %p83
      %s85 = ssub.s32 %s30, %s37
      %p86 = scmp.eq.s32.totalorder %s85, 0
      %s88 = sadd.s32 %s87, 1
      %s89 = scalar_select %p86, %s87, %s88
      %p92 = pneg %p86
      %p93 = scmp.eq.s32.totalorder %s30, 1
      %p94 = por %p92, %p93
      %p95 = scmp.ne.s32.totalorder %s87, %s90
      %p96 = scmp.eq.s32.totalorder %s30, 0
      %p97 = por %p95, %p96
      %p98 = scmp.ne.s32.totalorder %s87, %s90
      %p99 = scmp.eq.s32.totalorder %s35, 1
      %p100 = por %p98, %p99
      %p101 = scmp.ne.s32.totalorder %s90, %s91
      %p102 = scmp.eq.s32.totalorder %s35, 0
      %p103 = por %p101, %p102
      %p104 = scmp.ne.s32.totalorder %s90, %s91
      %p105 = scmp.eq.s32.totalorder %s36, 1
      %p106 = por %p104, %p105
      %p108 = scmp.ne.s32.totalorder %s91, %s107
      %p109 = scmp.eq.s32.totalorder %s36, 0
      %p110 = por %p108, %p109
      %s111 = ssub.s32 %s30, %s37
      %p112 = scmp.eq.s32.totalorder %s111, 0
      %s114 = sadd.s32 %s113, 1
      %s115 = scalar_select %p112, %s113, %s114
      %p118 = pneg %p112
      %p119 = scmp.eq.s32.totalorder %s30, 1
      %p120 = por %p118, %p119
      %p121 = scmp.ne.s32.totalorder %s113, %s116
      %p122 = scmp.eq.s32.totalorder %s30, 0
      %p123 = por %p121, %p122
      %p124 = scmp.ne.s32.totalorder %s113, %s116
      %p125 = scmp.eq.s32.totalorder %s35, 1
      %p126 = por %p124, %p125
      %p127 = scmp.ne.s32.totalorder %s116, %s117
      %p128 = scmp.eq.s32.totalorder %s35, 0
      %p129 = por %p127, %p128
      %p130 = scmp.ne.s32.totalorder %s116, %s117
      %p131 = scmp.eq.s32.totalorder %s36, 1
      %p132 = por %p130, %p131
      %p134 = scmp.ne.s32.totalorder %s117, %s133
      %p135 = scmp.eq.s32.totalorder %s36, 0
      %p136 = por %p134, %p135
      %s137 = ssub.s32 %s30, %s37
      %p138 = scmp.eq.s32.totalorder %s137, 0
      %s140 = sadd.s32 %s139, 1
      %s141 = scalar_select %p138, %s139, %s140
      %p144 = pneg %p138
      %p145 = scmp.eq.s32.totalorder %s30, 1
      %p146 = por %p144, %p145
      %p147 = scmp.ne.s32.totalorder %s139, %s142
      %p148 = scmp.eq.s32.totalorder %s30, 0
      %p149 = por %p147, %p148
      %p150 = scmp.ne.s32.totalorder %s139, %s142
      %p151 = scmp.eq.s32.totalorder %s35, 1
      %p152 = por %p150, %p151
      %p153 = scmp.ne.s32.totalorder %s142, %s143
      %p154 = scmp.eq.s32.totalorder %s35, 0
      %p155 = por %p153, %p154
      %p156 = scmp.ne.s32.totalorder %s142, %s143
      %p157 = scmp.eq.s32.totalorder %s36, 1
      %p158 = por %p156, %p157
      %p160 = scmp.ne.s32.totalorder %s143, %s159
      %p161 = scmp.eq.s32.totalorder %s36, 0
      %p162 = por %p160, %p161
      %s163 = ssub.s32 %s30, %s37
      %p164 = scmp.eq.s32.totalorder %s163, 0
      %s166 = sadd.s32 %s165, 1
      %s167 = scalar_select %p164, %s165, %s166
      %p170 = pneg %p164
      %p171 = scmp.eq.s32.totalorder %s30, 1
      %p172 = por %p170, %p171
      %p173 = scmp.ne.s32.totalorder %s165, %s168
      %p174 = scmp.eq.s32.totalorder %s30, 0
      %p175 = por %p173, %p174
      %p176 = scmp.ne.s32.totalorder %s165, %s168
      %p177 = scmp.eq.s32.totalorder %s35, 1
      %p178 = por %p176, %p177
      %p179 = scmp.ne.s32.totalorder %s168, %s169
      %p180 = scmp.eq.s32.totalorder %s35, 0
      %p181 = por %p179, %p180
      %p182 = scmp.ne.s32.totalorder %s168, %s169
      %p183 = scmp.eq.s32.totalorder %s36, 1
      %p184 = por %p182, %p183
      %p186 = scmp.ne.s32.totalorder %s169, %s185
      %p187 = scmp.eq.s32.totalorder %s36, 0
      %p188 = por %p186, %p187
      %s189 = ssub.s32 %s30, %s37
      %p190 = scmp.eq.s32.totalorder %s189, 0
      %s192 = sadd.s32 %s191, 1
      %s193 = scalar_select %p190, %s191, %s192
      %p196 = pneg %p190
      %p197 = scmp.eq.s32.totalorder %s30, 1
      %p198 = por %p196, %p197
      %p199 = scmp.ne.s32.totalorder %s191, %s194
      %p200 = scmp.eq.s32.totalorder %s30, 0
      %p201 = por %p199, %p200
      %p202 = scmp.ne.s32.totalorder %s191, %s194
      %p203 = scmp.eq.s32.totalorder %s35, 1
      %p204 = por %p202, %p203
      %p205 = scmp.ne.s32.totalorder %s194, %s195
      %p206 = scmp.eq.s32.totalorder %s35, 0
      %p207 = por %p205, %p206
      %p208 = scmp.ne.s32.totalorder %s194, %s195
      %p209 = scmp.eq.s32.totalorder %s36, 1
      %p210 = por %p208, %p209
      %p212 = scmp.ne.s32.totalorder %s195, %s211
      %p213 = scmp.eq.s32.totalorder %s36, 0
      %p214 = por %p212, %p213
      %s215 = ssub.s32 %s30, %s37
      %p216 = scmp.eq.s32.totalorder %s215, 0
      %s218 = sadd.s32 %s217, 1
      %s219 = scalar_select %p216, %s217, %s218
      %p222 = pneg %p216
      %p223 = scmp.eq.s32.totalorder %s30, 1
      %p224 = por %p222, %p223
      %p225 = scmp.ne.s32.totalorder %s217, %s220
      %p226 = scmp.eq.s32.totalorder %s30, 0
      %p227 = por %p225, %p226
      %p228 = scmp.ne.s32.totalorder %s217, %s220
      %p229 = scmp.eq.s32.totalorder %s35, 1
      %p230 = por %p228, %p229
      %p231 = scmp.ne.s32.totalorder %s220, %s221
      %p232 = scmp.eq.s32.totalorder %s35, 0
      %p233 = por %p231, %p232
      %p234 = scmp.ne.s32.totalorder %s220, %s221
      %p235 = scmp.eq.s32.totalorder %s36, 1
      %p236 = por %p234, %p235
      %p238 = scmp.ne.s32.totalorder %s221, %s237
      %p239 = scmp.eq.s32.totalorder %s36, 0
      %p240 = por %p238, %p239
      %s241 = ssub.s32 %s30, %s37
      %p242 = scmp.eq.s32.totalorder %s241, 0
      %s244 = sadd.s32 %s243, 1
      %s245 = scalar_select %p242, %s243, %s244
      %p248 = pneg %p242
      %p249 = scmp.eq.s32.totalorder %s30, 1
      %p250 = por %p248, %p249
      %p251 = scmp.ne.s32.totalorder %s243, %s246
      %p252 = scmp.eq.s32.totalorder %s30, 0
      %p253 = por %p251, %p252
      %p254 = scmp.ne.s32.totalorder %s243, %s246
      %p255 = scmp.eq.s32.totalorder %s35, 1
      %p256 = por %p254, %p255
      %p257 = scmp.ne.s32.totalorder %s246, %s247
      %p258 = scmp.eq.s32.totalorder %s35, 0
      %p259 = por %p257, %p258
      %p260 = scmp.ne.s32.totalorder %s246, %s247
      %p261 = scmp.eq.s32.totalorder %s36, 1
      %p262 = por %p260, %p261
      %p264 = scmp.ne.s32.totalorder %s247, %s263
      %p265 = scmp.eq.s32.totalorder %s36, 0
      %p266 = por %p264, %p265
      %s267 = ssub.s32 %s30, %s37
      %p268 = scmp.eq.s32.totalorder %s267, 0
      %s270 = sadd.s32 %s269, 1
      %s271 = scalar_select %p268, %s269, %s270
      %p274 = pneg %p268
      %p275 = scmp.eq.s32.totalorder %s30, 1
      %p276 = por %p274, %p275
      %p277 = scmp.ne.s32.totalorder %s269, %s272
      %p278 = scmp.eq.s32.totalorder %s30, 0
      %p279 = por %p277, %p278
      %p280 = scmp.ne.s32.totalorder %s269, %s272
      %p281 = scmp.eq.s32.totalorder %s35, 1
      %p282 = por %p280, %p281
      %p283 = scmp.ne.s32.totalorder %s272, %s273
      %p284 = scmp.eq.s32.totalorder %s35, 0
      %p285 = por %p283, %p284
      %p286 = scmp.ne.s32.totalorder %s272, %s273
      %p287 = scmp.eq.s32.totalorder %s36, 1
      %p288 = por %p286, %p287
      %p290 = scmp.ne.s32.totalorder %s273, %s289
      %p291 = scmp.eq.s32.totalorder %s36, 0
      %p292 = por %p290, %p291
      %s293 = ssub.s32 %s30, %s37
      %p294 = scmp.eq.s32.totalorder %s293, 0
      %s296 = sadd.s32 %s295, 1
      %s297 = scalar_select %p294, %s295, %s296
      %p300 = pneg %p294
      %p301 = scmp.eq.s32.totalorder %s30, 1
      %p302 = por %p300, %p301
      %p303 = scmp.ne.s32.totalorder %s295, %s298
      %p304 = scmp.eq.s32.totalorder %s30, 0
      %p305 = por %p303, %p304
      %p306 = scmp.ne.s32.totalorder %s295, %s298
      %p307 = scmp.eq.s32.totalorder %s35, 1
      %p308 = por %p306, %p307
      %p309 = scmp.ne.s32.totalorder %s298, %s299
      %p310 = scmp.eq.s32.totalorder %s35, 0
      %p311 = por %p309, %p310
      %p312 = scmp.ne.s32.totalorder %s298, %s299
      %p313 = scmp.eq.s32.totalorder %s36, 1
      %p314 = por %p312, %p313
      %p316 = scmp.ne.s32.totalorder %s299, %s315
      %p317 = scmp.eq.s32.totalorder %s36, 0
      %p318 = por %p316, %p317
      %s319 = ssub.s32 %s30, %s37
      %p320 = scmp.eq.s32.totalorder %s319, 0
      %s322 = sadd.s32 %s321, 1
      %s323 = scalar_select %p320, %s321, %s322
      %p326 = pneg %p320
      %p327 = scmp.eq.s32.totalorder %s30, 1
      %p328 = por %p326, %p327
      %p329 = scmp.ne.s32.totalorder %s321, %s324
      %p330 = scmp.eq.s32.totalorder %s30, 0
      %p331 = por %p329, %p330
      %p332 = scmp.ne.s32.totalorder %s321, %s324
      %p333 = scmp.eq.s32.totalorder %s35, 1
      %p334 = por %p332, %p333
      %p335 = scmp.ne.s32.totalorder %s324, %s325
      %p336 = scmp.eq.s32.totalorder %s35, 0
      %p337 = por %p335, %p336
      %p338 = scmp.ne.s32.totalorder %s324, %s325
      %p339 = scmp.eq.s32.totalorder %s36, 1
      %p340 = por %p338, %p339
      %p342 = scmp.ne.s32.totalorder %s325, %s341
      %p343 = scmp.eq.s32.totalorder %s36, 0
      %p344 = por %p342, %p343
      %s345 = ssub.s32 %s30, %s37
      %p346 = scmp.eq.s32.totalorder %s345, 0
      %s348 = sadd.s32 %s347, 1
      %s349 = scalar_select %p346, %s347, %s348
      %p352 = pneg %p346
      %p353 = scmp.eq.s32.totalorder %s30, 1
      %p354 = por %p352, %p353
      %p355 = scmp.ne.s32.totalorder %s347, %s350
      %p356 = scmp.eq.s32.totalorder %s30, 0
      %p357 = por %p355, %p356
      %p358 = scmp.ne.s32.totalorder %s347, %s350
      %p359 = scmp.eq.s32.totalorder %s35, 1
      %p360 = por %p358, %p359
      %p361 = scmp.ne.s32.totalorder %s350, %s351
      %p362 = scmp.eq.s32.totalorder %s35, 0
      %p363 = por %p361, %p362
      %p364 = scmp.ne.s32.totalorder %s350, %s351
      %p365 = scmp.eq.s32.totalorder %s36, 1
      %p366 = por %p364, %p365
      %p368 = scmp.ne.s32.totalorder %s351, %s367
      %p369 = scmp.eq.s32.totalorder %s36, 0
      %p370 = por %p368, %p369
      %s372 = sadd.s32 %s371, 1
      %p375 = scmp.eq.s32.totalorder %s30, 1
      %p376 = scmp.ne.s32.totalorder %s371, %s373
      %p377 = scmp.eq.s32.totalorder %s30, 0
      %p378 = por %p376, %p377
      %p379 = scmp.ne.s32.totalorder %s371, %s373
      %p380 = scmp.eq.s32.totalorder %s35, 1
      %p381 = por %p379, %p380
      %p382 = scmp.ne.s32.totalorder %s373, %s374
      %p383 = scmp.eq.s32.totalorder %s35, 0
      %p384 = por %p382, %p383
      %p385 = scmp.ne.s32.totalorder %s373, %s374
      %p386 = scmp.eq.s32.totalorder %s36, 1
      %p387 = por %p385, %p386
      %p389 = scmp.ne.s32.totalorder %s374, %s388
      %p390 = scmp.eq.s32.totalorder %s36, 0
      %p391 = por %p389, %p390
      %s393 = sadd.s32 %s392, 1
      %p396 = scmp.eq.s32.totalorder %s30, 1
      %p397 = scmp.ne.s32.totalorder %s392, %s394
      %p398 = scmp.eq.s32.totalorder %s30, 0
      %p399 = por %p397, %p398
      %p400 = scmp.ne.s32.totalorder %s392, %s394
      %p401 = scmp.eq.s32.totalorder %s35, 1
      %p402 = por %p400, %p401
      %p403 = scmp.ne.s32.totalorder %s394, %s395
      %p404 = scmp.eq.s32.totalorder %s35, 0
      %p405 = por %p403, %p404
      %p406 = scmp.ne.s32.totalorder %s394, %s395
      %p407 = scmp.eq.s32.totalorder %s36, 1
      %p408 = por %p406, %p407
      %p410 = scmp.ne.s32.totalorder %s395, %s409
      %p411 = scmp.eq.s32.totalorder %s36, 0
      %p412 = por %p410, %p411
      %s414 = sadd.s32 %s413, 1
      %p417 = scmp.eq.s32.totalorder %s30, 1
      %p418 = scmp.ne.s32.totalorder %s413, %s415
      %p419 = scmp.eq.s32.totalorder %s30, 0
      %p420 = por %p418, %p419
      %p421 = scmp.ne.s32.totalorder %s413, %s415
      %p422 = scmp.eq.s32.totalorder %s35, 1
      %p423 = por %p421, %p422
      %p424 = scmp.ne.s32.totalorder %s415, %s416
      %p425 = scmp.eq.s32.totalorder %s35, 0
      %p426 = por %p424, %p425
      %p427 = scmp.ne.s32.totalorder %s415, %s416
      %p428 = scmp.eq.s32.totalorder %s36, 1
      %p429 = por %p427, %p428
      %p431 = scmp.ne.s32.totalorder %s416, %s430
      %p432 = scmp.eq.s32.totalorder %s36, 0
      %p433 = por %p431, %p432
      %s435 = sadd.s32 %s434, 1
      %p438 = scmp.eq.s32.totalorder %s30, 1
      %p439 = scmp.ne.s32.totalorder %s434, %s436
      %p440 = scmp.eq.s32.totalorder %s30, 0
      %p441 = por %p439, %p440
      %p442 = scmp.ne.s32.totalorder %s434, %s436
      %p443 = scmp.eq.s32.totalorder %s35, 1
      %p444 = por %p442, %p443
      %p445 = scmp.ne.s32.totalorder %s436, %s437
      %p446 = scmp.eq.s32.totalorder %s35, 0
      %p447 = por %p445, %p446
      %p448 = scmp.ne.s32.totalorder %s436, %s437
      %p449 = scmp.eq.s32.totalorder %s36, 1
      %p450 = por %p448, %p449
      %p452 = scmp.ne.s32.totalorder %s437, %s451
      %p453 = scmp.eq.s32.totalorder %s36, 0
      %p454 = por %p452, %p453
      %p455 = scmp.le.s32.totalorder 1, %s30
      %p456 = scmp.lt.s32.totalorder %s30, 3
      %p457 = pnand %p455, %p456
      %p458 = pneg %p457
      // Predicated region
      $region9: #{tpu_custom_call.1} parent=5 // pred_check
        _
      $region10: #{tpu_custom_call.1} parent=5 // pred_check_branch
        %460 = sbr.rel (%p457) target = $region12
      $region11: #{tpu_custom_call.1} parent=5 // pred_region
        %s461 = ssub.s32 %s30, 1
        // Predicated region
        $region13: #{tpu_custom_call.1} parent=11 // pred_check
          %p462 = pneg %p51
        $region14: #{tpu_custom_call.1} parent=11 // pred_check_branch
          %464 = sbr.rel (%p462) target = $region16
        $region15: #{tpu_custom_call.1} parent=11 // pred_region
          _
        $region16: #{tpu_custom_call.1} parent=11 // pred_fallthru
          _
        // Predicated region
        $region17: #{tpu_custom_call.1} parent=11 // pred_check
          %p465 = pneg %p384
        $region18: #{tpu_custom_call.1} parent=11 // pred_check_branch
          %467 = sbr.rel (%p465) target = $region20
        $region19: #{tpu_custom_call.1} parent=11 // pred_region
          _
        $region20: #{tpu_custom_call.1} parent=11 // pred_fallthru
          _
        // Predicated region
        $region21: #{tpu_custom_call.1} parent=11 // pred_check
          %p468 = pneg %p405
        $region22: #{tpu_custom_call.1} parent=11 // pred_check_branch
          %470 = sbr.rel (%p468) target = $region24
        $region23: #{tpu_custom_call.1} parent=11 // pred_region
          _
        $region24: #{tpu_custom_call.1} parent=11 // pred_fallthru
          _
        // Predicated region
        $region25: #{tpu_custom_call.1} parent=11 // pred_check
          %p471 = pneg %p426
        $region26: #{tpu_custom_call.1} parent=11 // pred_check_branch
          %473 = sbr.rel (%p471) target = $region28
        $region27: #{tpu_custom_call.1} parent=11 // pred_region
          _
        $region28: #{tpu_custom_call.1} parent=11 // pred_fallthru
          _
      $region12: #{tpu_custom_call.1} parent=5 // pred_fallthru
        _
      %p474 = scmp.lt.s32.totalorder %s30, 2
      // Predicated region
      $region29: #{tpu_custom_call.1} parent=5 // pred_check
        %p475 = pneg %p474
      $region30: #{tpu_custom_call.1} parent=5 // pred_check_branch
        %477 = sbr.rel (%p475) target = $region32
      $region31: #{tpu_custom_call.1} parent=5 // pred_region
        // Predicated region
        $region33: #{tpu_custom_call.1} parent=31 // pred_check
          %p478 = pneg %p71
        $region34: #{tpu_custom_call.1} parent=31 // pred_check_branch
          %480 = sbr.rel (%p478) target = $region36
        $region35: #{tpu_custom_call.1} parent=31 // pred_region
          %p481 = scmp.lt.s32.totalorder %s30, 1
          %s482 = scalar_select %p481, %s30, 1
          %s483 = scalar_lea.vmem %s2, %s482
        $region36: #{tpu_custom_call.1} parent=31 // pred_fallthru
          _
        // Predicated region
        $region37: #{tpu_custom_call.1} parent=31 // pred_check
          %p484 = pneg %p97
        $region38: #{tpu_custom_call.1} parent=31 // pred_check_branch
          %486 = sbr.rel (%p484) target = $region40
        $region39: #{tpu_custom_call.1} parent=31 // pred_region
          %p487 = scmp.lt.s32.totalorder %s30, 1
          %s488 = scalar_select %p487, %s30, 1
          %s489 = scalar_lea.vmem %s3, %s488
        $region40: #{tpu_custom_call.1} parent=31 // pred_fallthru
          _
        // Predicated region
        $region41: #{tpu_custom_call.1} parent=31 // pred_check
          %p490 = pneg %p123
        $region42: #{tpu_custom_call.1} parent=31 // pred_check_branch
          %492 = sbr.rel (%p490) target = $region44
        $region43: #{tpu_custom_call.1} parent=31 // pred_region
          %p493 = scmp.lt.s32.totalorder %s30, 1
          %s494 = scalar_select %p493, %s30, 1
          %s495 = smul.addr %s494, 4
          %s496 = smul.addr %s495, 4
          %s497 = scalar_lea.vmem %s4, %s496
        $region44: #{tpu_custom_call.1} parent=31 // pred_fallthru
          _
        // Predicated region
        $region45: #{tpu_custom_call.1} parent=31 // pred_check
          %p498 = pneg %p149
        $region46: #{tpu_custom_call.1} parent=31 // pred_check_branch
          %500 = sbr.rel (%p498) target = $region48
        $region47: #{tpu_custom_call.1} parent=31 // pred_region
          %p501 = scmp.lt.s32.totalorder %s30, 1
          %s502 = scalar_select %p501, %s30, 1
          %s503 = scalar_lea.vmem %s5, %s502
        $region48: #{tpu_custom_call.1} parent=31 // pred_fallthru
          _
        // Predicated region
        $region49: #{tpu_custom_call.1} parent=31 // pred_check
          %p504 = pneg %p175
        $region50: #{tpu_custom_call.1} parent=31 // pred_check_branch
          %506 = sbr.rel (%p504) target = $region52
        $region51: #{tpu_custom_call.1} parent=31 // pred_region
          %p507 = scmp.lt.s32.totalorder %s30, 1
          %s508 = scalar_select %p507, %s30, 1
          %s509 = smul.addr %s508, 4
          %s510 = smul.addr %s509, 4
          %s511 = scalar_lea.vmem %s6, %s510
        $region52: #{tpu_custom_call.1} parent=31 // pred_fallthru
          _
        // Predicated region
        $region53: #{tpu_custom_call.1} parent=31 // pred_check
          %p512 = pneg %p201
        $region54: #{tpu_custom_call.1} parent=31 // pred_check_branch
          %514 = sbr.rel (%p512) target = $region56
        $region55: #{tpu_custom_call.1} parent=31 // pred_region
          %p515 = scmp.lt.s32.totalorder %s30, 1
          %s516 = scalar_select %p515, %s30, 1
          %s517 = scalar_lea.vmem %s7, %s516
        $region56: #{tpu_custom_call.1} parent=31 // pred_fallthru
          _
        // Predicated region
        $region57: #{tpu_custom_call.1} parent=31 // pred_check
          %p518 = pneg %p227
        $region58: #{tpu_custom_call.1} parent=31 // pred_check_branch
          %520 = sbr.rel (%p518) target = $region60
        $region59: #{tpu_custom_call.1} parent=31 // pred_region
          %p521 = scmp.lt.s32.totalorder %s30, 1
          %s522 = scalar_select %p521, %s30, 1
          %s523 = scalar_lea.vmem %s8, %s522
        $region60: #{tpu_custom_call.1} parent=31 // pred_fallthru
          _
        // Predicated region
        $region61: #{tpu_custom_call.1} parent=31 // pred_check
          %p524 = pneg %p253
        $region62: #{tpu_custom_call.1} parent=31 // pred_check_branch
          %526 = sbr.rel (%p524) target = $region64
        $region63: #{tpu_custom_call.1} parent=31 // pred_region
          %p527 = scmp.lt.s32.totalorder %s30, 1
          %s528 = scalar_select %p527, %s30, 1
          %s529 = scalar_lea.vmem %s9, %s528
        $region64: #{tpu_custom_call.1} parent=31 // pred_fallthru
          _
        // Predicated region
        $region65: #{tpu_custom_call.1} parent=31 // pred_check
          %p530 = pneg %p279
        $region66: #{tpu_custom_call.1} parent=31 // pred_check_branch
          %532 = sbr.rel (%p530) target = $region68
        $region67: #{tpu_custom_call.1} parent=31 // pred_region
          %p533 = scmp.lt.s32.totalorder %s30, 1
          %s534 = scalar_select %p533, %s30, 1
          %s535 = smul.addr %s534, 4
          %s536 = smul.addr %s535, 4
          %s537 = scalar_lea.vmem %s10, %s536
        $region68: #{tpu_custom_call.1} parent=31 // pred_fallthru
          _
        // Predicated region
        $region69: #{tpu_custom_call.1} parent=31 // pred_check
          %p538 = pneg %p305
        $region70: #{tpu_custom_call.1} parent=31 // pred_check_branch
          %540 = sbr.rel (%p538) target = $region72
        $region71: #{tpu_custom_call.1} parent=31 // pred_region
          %p541 = scmp.lt.s32.totalorder %s30, 1
          %s542 = scalar_select %p541, %s30, 1
          %s543 = scalar_lea.vmem %s11, %s542
        $region72: #{tpu_custom_call.1} parent=31 // pred_fallthru
          _
        // Predicated region
        $region73: #{tpu_custom_call.1} parent=31 // pred_check
          %p544 = pneg %p331
        $region74: #{tpu_custom_call.1} parent=31 // pred_check_branch
          %546 = sbr.rel (%p544) target = $region76
        $region75: #{tpu_custom_call.1} parent=31 // pred_region
          %p547 = scmp.lt.s32.totalorder %s30, 1
          %s548 = scalar_select %p547, %s30, 1
          %s549 = smul.addr %s548, 16
          %s550 = smul.addr %s549, 4
          %s551 = scalar_lea.vmem %s12, %s550
        $region76: #{tpu_custom_call.1} parent=31 // pred_fallthru
          _
        // Predicated region
        $region77: #{tpu_custom_call.1} parent=31 // pred_check
          %p552 = pneg %p357
        $region78: #{tpu_custom_call.1} parent=31 // pred_check_branch
          %554 = sbr.rel (%p552) target = $region80
        $region79: #{tpu_custom_call.1} parent=31 // pred_region
          %p555 = scmp.lt.s32.totalorder %s30, 1
          %s556 = scalar_select %p555, %s30, 1
          %s557 = scalar_lea.vmem %s13, %s556
        $region80: #{tpu_custom_call.1} parent=31 // pred_fallthru
          _
      $region32: #{tpu_custom_call.1} parent=5 // pred_fallthru
        _
      %p558 = scmp.le.s32.totalorder 1, %s30
      %p559 = scmp.lt.s32.totalorder %s30, 3
      %p560 = pnand %p558, %p559
      %p561 = pneg %p560
      // Predicated region
      $region81: #{tpu_custom_call.1} parent=5 // pred_check
        _
      $region82: #{tpu_custom_call.1} parent=5 // pred_check_branch
        %563 = sbr.rel (%p560) target = $region84
      $region83: #{tpu_custom_call.1} parent=5 // pred_region
        %s564 = ssub.s32 %s30, 1
        %p565 = pneg %p51
        %p566 = pneg %p48
        %p567 = scmp.lt.s32.totalorder %s35, 1
        %s568 = scalar_select %p567, %s35, 1
        %s569 = scalar_lea.vmem %s2, %s568
        %p570 = pneg %p77
        %p571 = pneg %p74
        %p572 = scmp.lt.s32.totalorder %s35, 1
        %s573 = scalar_select %p572, %s35, 1
        %s574 = scalar_lea.vmem %s3, %s573
        %p575 = pneg %p103
        %p576 = pneg %p100
        %p577 = scmp.lt.s32.totalorder %s35, 1
        %s578 = scalar_select %p577, %s35, 1
        %s579 = smul.addr %s578, 4
        %s580 = smul.addr %s579, 4
        %s581 = scalar_lea.vmem %s4, %s580
        %p582 = pneg %p129
        %p583 = pneg %p126
        %p584 = scmp.lt.s32.totalorder %s35, 1
        %s585 = scalar_select %p584, %s35, 1
        %s586 = scalar_lea.vmem %s5, %s585
        %p587 = pneg %p155
        %p588 = pneg %p152
        %p589 = scmp.lt.s32.totalorder %s35, 1
        %s590 = scalar_select %p589, %s35, 1
        %s591 = smul.addr %s590, 4
        %s592 = smul.addr %s591, 4
        %s593 = scalar_lea.vmem %s6, %s592
        %p594 = pneg %p181
        %p595 = pneg %p178
        %p596 = scmp.lt.s32.totalorder %s35, 1
        %s597 = scalar_select %p596, %s35, 1
        %s598 = scalar_lea.vmem %s7, %s597
        %p599 = pneg %p207
        %p600 = pneg %p204
        %p601 = scmp.lt.s32.totalorder %s35, 1
        %s602 = scalar_select %p601, %s35, 1
        %s603 = scalar_lea.vmem %s8, %s602
        %p604 = pneg %p233
        %p605 = pneg %p230
        %p606 = scmp.lt.s32.totalorder %s35, 1
        %s607 = scalar_select %p606, %s35, 1
        %s608 = scalar_lea.vmem %s9, %s607
        %p609 = pneg %p259
        %p610 = pneg %p256
        %p611 = scmp.lt.s32.totalorder %s35, 1
        %s612 = scalar_select %p611, %s35, 1
        %s613 = smul.addr %s612, 4
        %s614 = smul.addr %s613, 4
        %s615 = scalar_lea.vmem %s10, %s614
        %p616 = pneg %p285
        %p617 = pneg %p282
        %p618 = scmp.lt.s32.totalorder %s35, 1
        %s619 = scalar_select %p618, %s35, 1
        %s620 = scalar_lea.vmem %s11, %s619
        %p621 = pneg %p311
        %p622 = pneg %p308
        %p623 = scmp.lt.s32.totalorder %s35, 1
        %s624 = scalar_select %p623, %s35, 1
        %s625 = smul.addr %s624, 16
        %s626 = smul.addr %s625, 4
        %s627 = scalar_lea.vmem %s12, %s626
        %p628 = pneg %p337
        %p629 = pneg %p334
        %p630 = scmp.lt.s32.totalorder %s35, 1
        %s631 = scalar_select %p630, %s35, 1
        %s632 = scalar_lea.vmem %s13, %s631
        %p633 = pneg %p363
        %p634 = pneg %p360
        %p635 = pneg %p384
        %p636 = pneg %p381
        %p637 = pneg %p405
        %p638 = pneg %p402
        %p639 = pneg %p426
        %p640 = pneg %p423
        %p641 = pneg %p447
        %p642 = pneg %p444
        %p643 = scmp.lt.s32.totalorder %s35, 1
        %s644 = scalar_select %p643, %s35, 1
        %s645 = scalar_lea.vmem %s2, %s644
        %p646 = scmp.lt.s32.totalorder %s35, 1
        %s647 = scalar_select %p646, %s35, 1
        %s648 = scalar_lea.vmem %s3, %s647
        %p649 = scmp.lt.s32.totalorder %s35, 1
        %s650 = scalar_select %p649, %s35, 1
        %s651 = smul.addr %s650, 4
        %s652 = smul.addr %s651, 4
        %s653 = scalar_lea.vmem %s4, %s652
        %p654 = scmp.lt.s32.totalorder %s35, 1
        %s655 = scalar_select %p654, %s35, 1
        %s656 = scalar_lea.vmem %s5, %s655
        %p657 = scmp.lt.s32.totalorder %s35, 1
        %s658 = scalar_select %p657, %s35, 1
        %s659 = smul.addr %s658, 4
        %s660 = smul.addr %s659, 4
        %s661 = scalar_lea.vmem %s6, %s660
        %p662 = scmp.lt.s32.totalorder %s35, 1
        %s663 = scalar_select %p662, %s35, 1
        %s664 = scalar_lea.vmem %s7, %s663
        %p665 = scmp.lt.s32.totalorder %s35, 1
        %s666 = scalar_select %p665, %s35, 1
        %s667 = scalar_lea.vmem %s8, %s666
        %p668 = scmp.lt.s32.totalorder %s35, 1
        %s669 = scalar_select %p668, %s35, 1
        %s670 = scalar_lea.vmem %s9, %s669
        %p671 = scmp.lt.s32.totalorder %s35, 1
        %s672 = scalar_select %p671, %s35, 1
        %s673 = smul.addr %s672, 4
        %s674 = smul.addr %s673, 4
        %s675 = scalar_lea.vmem %s10, %s674
        %p676 = scmp.lt.s32.totalorder %s35, 1
        %s677 = scalar_select %p676, %s35, 1
        %s678 = scalar_lea.vmem %s11, %s677
        %p679 = scmp.lt.s32.totalorder %s35, 1
        %s680 = scalar_select %p679, %s35, 1
        %s681 = smul.addr %s680, 16
        %s682 = smul.addr %s681, 4
        %s683 = scalar_lea.vmem %s12, %s682
        %p684 = scmp.lt.s32.totalorder %s35, 1
        %s685 = scalar_select %p684, %s35, 1
        %s686 = scalar_lea.vmem %s13, %s685
        %p688 = scmp.eq.s32.totalorder %s35, 0
        // Predicated region
        $region85: #{tpu_custom_call.1} parent=83 // pred_check
          %p689 = pneg %p688
        $region86: #{tpu_custom_call.1} parent=83 // pred_check_branch
          %691 = sbr.rel (%p689) target = $region88
        $region87: #{tpu_custom_call.1} parent=83 // pred_region
          %v692 = vld [vmem:[%s1] sm:$0xff]
          %v693 = vld [vmem:[%s1 + $0x8] sm:$0xff]
          %vm694 = vcmask 261120
          %695 = vst.msk [vmem:[#allocation2] sm:$0xff] %vm694, %v692
          %696 = vst.msk [vmem:[#allocation2 + $0x8] sm:$0xff] %vm694, %v693
        $region88: #{tpu_custom_call.1} parent=83 // pred_fallthru
          _
        %v697 = vld [vmem:[#allocation2] sm:$0xff]
        %v698 = vld [vmem:[#allocation2 + $0x8] sm:$0xff]
        %v699 = vlaneseq
        %v700 = vshrl.u32 %v699, 7
        %v701 = vadd.s32 %v700, 8
        %v702 = vlaneseq
        %v703 = vand.u32 %v702, 127
        %vm704 = vcmp.ge.s32.totalorder %v700, 0
        %vm705 = vcmp.ge.s32.totalorder %v701, 0
        %vm706 = vcmp.lt.s32.totalorder %v700, 8
        %vm707 = vcmp.lt.s32.totalorder %v701, 8
        %vm708 = vmand %vm704, %vm706
        %vm709 = vmand %vm705, %vm707
        %vm710 = vcmp.ge.s32.totalorder %v703, 0
        %vm711 = vcmp.lt.s32.totalorder %v703, 8
        %vm712 = vmand %vm710, %vm711
        %vm713 = vmand %vm708, %vm712
        %vm714 = vmand %vm709, %vm712
        %vm715 = vcmp.ge.s32.totalorder %v700, 8
        %vm716 = vcmp.ge.s32.totalorder %v701, 8
        %vm717 = vcmp.lt.s32.totalorder %v700, 16
        %vm718 = vcmp.lt.s32.totalorder %v701, 16
        %vm719 = vmand %vm715, %vm717
        %vm720 = vmand %vm716, %vm718
        %vm721 = vcmp.ge.s32.totalorder %v703, 8
        %vm722 = vcmp.lt.s32.totalorder %v703, 16
        %vm723 = vmand %vm721, %vm722
        %vm724 = vmand %vm719, %vm723
        %vm725 = vmand %vm720, %vm723
        %vm726 = vmor %vm713, %vm724
        %vm727 = vmor %vm714, %vm725
        %vm728 = vcmp.le.s32.totalorder %v703, %v700
        %vm729 = vcmp.le.s32.totalorder %v703, %v701
        %vm730 = vmand %vm726, %vm728
        %vm731 = vmand %vm727, %vm729
        %v732 = vsel %vm730, 1, 0
        %v733 = vsel %vm731, 1, 0
        %v734 = vcvt.s32.f32 %v732
        %v735 = vcvt.s32.f32 %v733
        %v736 = vld [vmem:[%s645] sm:$0x1]
        %v737 = vld [vmem:[%s648] sm:$0x1]
        %vm738 = vcmask 261120
        %v739 = vsel %vm738, %v697, 0.0
        %740 = vadd.xlane.f32.xlu0 %v739
        %v741 = vpop.xlane.xlu0 %740
        %v742 = vsel %vm738, %v698, 0.0
        %743 = vadd.xlane.f32.xlu0 %v742
        %v744 = vpop.xlane.xlu0 %743
        %v745 = vrcp.pop 32.0
        %v746 = vmul.f32 %v741, %v745
        %v747 = vmul.f32 %v744, %v745
        %v748 = vsub.f32 %v697, %v746
        %v749 = vsub.f32 %v698, %v747
        %v750 = vmul.f32 %v748, %v748
        %v751 = vmul.f32 %v749, %v749
        %v752 = vsel %vm738, %v750, 0.0
        %753 = vadd.xlane.f32.xlu0 %v752
        %v754 = vpop.xlane.xlu0 %753
        %v755 = vsel %vm738, %v751, 0.0
        %756 = vadd.xlane.f32.xlu0 %v755
        %v757 = vpop.xlane.xlu0 %756
        %v758 = vmul.f32 %v754, %v745
        %v759 = vmul.f32 %v757, %v745
        %v760 = vadd.f32 %v758, 1e-05
        %v761 = vadd.f32 %v759, 1e-05
        %v762 = vrsqrt.pop %v760
        %v763 = vrsqrt.pop %v761
        %v764 = vmul.f32 %v748, %v762
        %v765 = vmul.f32 %v749, %v763
        %v767 = vlaneseq
        %v768 = vshrl.u32 %v767, 7
        %v769 = vsub.s32 0, %v768
        %v770 = vrot.slane %v736, %v769
        %v772 = vmul.f32 %v764, %v770
        %v773 = vmul.f32 %v765, %v770
        %v775 = vlaneseq
        %v776 = vshrl.u32 %v775, 7
        %v777 = vsub.s32 0, %v776
        %v778 = vrot.slane %v737, %v777
        %v780 = vadd.f32 %v772, %v778
        %v781 = vadd.f32 %v773, %v778
        %v782 = vpack.c.bf16 %v781, %v780
        %v783 = vld [vmem:[%s653] sm:$0xf]
        %v784 = vld [vmem:[%s653 + $0x4] sm:$0xf]
        %v785 = vld [vmem:[%s653 + $0x8] sm:$0xf]
        %v786 = vld [vmem:[%s653 + $0xc] sm:$0xf]
        %v787 = vld [vmem:[%s656] sm:$0x1]
        %v789 = vlaneseq
        %v790 = vshrl.u32 %v789, 7
        %v791 = vsub.s32 0, %v790
        %v792 = vrot.slane %v787, %v791
        %v798 = vunpack.c.l.b16 %v783
        %v799 = vunpack.c.l.b16 %v784
        %v800 = vunpack.c.l.b16 %v785
        %v801 = vunpack.c.l.b16 %v786
        %v802 = vpack.c.b16 %v799, %v798
        %v803 = vpack.c.b16 %v801, %v800
        %v807 = vsel %vm738, %v782, 0
        %809 = vmatprep.subr.bf16.mxu0 0
        %810 = vmatpush1.bf16.msra.mxu0 %v802
        %811 = vmatprep.subr.bf16.mxu0 0
        %812 = vmatpush1.bf16.msra.mxu0 %v803
        %813 = vmatprep.subr.bf16.mxu0 0
        %814 = vmatpush1.bf16.msra.mxu0 0
        %815 = vmatprep.subr.bf16.mxu0 0
        %816 = vmatpush1.bf16.msra.mxu0 0
        %817 = vmatprep.subr.bf16.mxu0 0
        %818 = vmatpush1.bf16.msra.mxu0 0
        %819 = vmatprep.subr.bf16.mxu0 0
        %820 = vmatpush1.bf16.msra.mxu0 0
        %821 = vmatprep.subr.bf16.mxu0 0
        %822 = vmatpush1.bf16.msra.mxu0 0
        %823 = vmatprep.subr.bf16.mxu0 0
        %824 = vmatpush1.bf16.msra.mxu0 0
        %825 = vmatprep.subr.bf16.mxu0 0
        %826 = vmatpush1.bf16.msra.mxu0 0
        %827 = vmatprep.subr.bf16.mxu0 0
        %828 = vmatpush1.bf16.msra.mxu0 0
        %829 = vmatprep.subr.bf16.mxu0 0
        %830 = vmatpush1.bf16.msra.mxu0 0
        %831 = vmatprep.subr.bf16.mxu0 0
        %832 = vmatpush1.bf16.msra.mxu0 0
        %833 = vmatprep.subr.bf16.mxu0 0
        %834 = vmatpush1.bf16.msra.mxu0 0
        %835 = vmatprep.subr.bf16.mxu0 0
        %836 = vmatpush1.bf16.msra.mxu0 0
        %837 = vmatprep.subr.bf16.mxu0 0
        %838 = vmatpush1.bf16.msra.mxu0 0
        %839 = vmatprep.subr.bf16.mxu0 0
        %840 = vmatpush1.bf16.msra.mxu0 0
        %841 = vmatprep.mubr.bf16.mxu0 0
        %842 = vmatmul.mubr.bf16.gmra.mrb[0].mxu0 %v807
        %v843 = vpop.f32.mrb[0].mxu0
        %v844 = vadd.f32 %v792, %v843
        %v845 = vpop.f32.mrb[0].mxu0
        %v846 = vpop.f32.mrb[0].mxu0
        %v847 = vadd.f32 %v792, %v846
        %v848 = vpop.f32.mrb[0].mxu0
        %849 = vdwg.mxu0
        %v850 = vpack.c.bf16 %v847, %v844
        %852 = vrot.lane.b32.xlu0 %v850, 96
        %v853 = vpop.permute.xlu0 %852
        %vm854 = vcmask 64512
        %v856 = vsel %vm854, %v850, 0
        %v859 = vsel %vm854, %v853, 0
        %861 = vmatprep.subr.bf16.mxu0 0
        %862 = vmatpush1.bf16.xpose.msra.mxu0 %v859
        %863 = vmatprep.subr.bf16.mxu0 0
        %864 = vmatpush1.bf16.xpose.msra.mxu0 0
        %865 = vmatprep.subr.bf16.mxu0 0
        %866 = vmatpush1.bf16.xpose.msra.mxu0 0
        %867 = vmatprep.subr.bf16.mxu0 0
        %868 = vmatpush1.bf16.xpose.msra.mxu0 0
        %869 = vmatprep.subr.bf16.mxu0 0
        %870 = vmatpush1.bf16.xpose.msra.mxu0 0
        %871 = vmatprep.subr.bf16.mxu0 0
        %872 = vmatpush1.bf16.xpose.msra.mxu0 0
        %873 = vmatprep.subr.bf16.mxu0 0
        %874 = vmatpush1.bf16.xpose.msra.mxu0 0
        %875 = vmatprep.subr.bf16.mxu0 0
        %876 = vmatpush1.bf16.xpose.msra.mxu0 0
        %877 = vmatprep.subr.bf16.mxu0 0
        %878 = vmatpush1.bf16.xpose.msra.mxu0 0
        %879 = vmatprep.subr.bf16.mxu0 0
        %880 = vmatpush1.bf16.xpose.msra.mxu0 0
        %881 = vmatprep.subr.bf16.mxu0 0
        %882 = vmatpush1.bf16.xpose.msra.mxu0 0
        %883 = vmatprep.subr.bf16.mxu0 0
        %884 = vmatpush1.bf16.xpose.msra.mxu0 0
        %885 = vmatprep.subr.bf16.mxu0 0
        %886 = vmatpush1.bf16.xpose.msra.mxu0 0
        %887 = vmatprep.subr.bf16.mxu0 0
        %888 = vmatpush1.bf16.xpose.msra.mxu0 0
        %889 = vmatprep.subr.bf16.mxu0 0
        %890 = vmatpush1.bf16.xpose.msra.mxu0 0
        %891 = vmatprep.subr.bf16.mxu0 0
        %892 = vmatpush1.bf16.xpose.msra.mxu0 0
        %893 = vmatprep.mubr.bf16.mxu0 0
        %894 = vmatmul.mubr.bf16.gmra.mrb[0].mxu0 %v856
        %v895 = vpop.f32.mrb[0].mxu0
        %v896 = vadd.f32 0.0, %v895
        %v897 = vpop.f32.mrb[0].mxu0
        %v898 = vpop.f32.mrb[0].mxu0
        %v899 = vadd.f32 0.0, %v898
        %v900 = vpop.f32.mrb[0].mxu0
        %901 = vdwg.mxu0
        %v902 = vmul.f32 %v896, 1.442695
        %v903 = vpow.pop %v902
        %v904 = vmul.f32 %v899, 1.442695
        %v905 = vpow.pop %v904
        %v906 = vmul.f32 %v903, %v734
        %v907 = vmul.f32 %v905, %v735
        %vm908 = vcmask 130048
        %v909 = vsel %vm908, %v906, 0.0
        %910 = vadd.xlane.f32.xlu0 %v909
        %v911 = vpop.xlane.xlu0 %910
        %v912 = vsel %vm908, %v907, 0.0
        %913 = vadd.xlane.f32.xlu0 %v912
        %v914 = vpop.xlane.xlu0 %913
        %v915 = vrcp.pop %v911
        %v916 = vrcp.pop %v914
        %v917 = vmul.f32 %v906, %v915
        %v918 = vmul.f32 %v907, %v916
        %v919 = vpack.c.bf16 %v918, %v917
        %920 = vrot.lane.b32.xlu0 %v850, 64
        %v921 = vpop.permute.xlu0 %920
        %v924 = vsel %vm908, %v919, 0
        %926 = vmatprep.subr.bf16.mxu0 0
        %927 = vmatpush1.bf16.msra.mxu0 %v921
        %928 = vmatprep.subr.bf16.mxu0 0
        %929 = vmatpush1.bf16.msra.mxu0 0
        %930 = vmatprep.subr.bf16.mxu0 0
        %931 = vmatpush1.bf16.msra.mxu0 0
        %932 = vmatprep.subr.bf16.mxu0 0
        %933 = vmatpush1.bf16.msra.mxu0 0
        %934 = vmatprep.subr.bf16.mxu0 0
        %935 = vmatpush1.bf16.msra.mxu0 0
        %936 = vmatprep.subr.bf16.mxu0 0
        %937 = vmatpush1.bf16.msra.mxu0 0
        %938 = vmatprep.subr.bf16.mxu0 0
        %939 = vmatpush1.bf16.msra.mxu0 0
        %940 = vmatprep.subr.bf16.mxu0 0
        %941 = vmatpush1.bf16.msra.mxu0 0
        %942 = vmatprep.subr.bf16.mxu0 0
        %943 = vmatpush1.bf16.msra.mxu0 0
        %944 = vmatprep.subr.bf16.mxu0 0
        %945 = vmatpush1.bf16.msra.mxu0 0
        %946 = vmatprep.subr.bf16.mxu0 0
        %947 = vmatpush1.bf16.msra.mxu0 0
        %948 = vmatprep.subr.bf16.mxu0 0
        %949 = vmatpush1.bf16.msra.mxu0 0
        %950 = vmatprep.subr.bf16.mxu0 0
        %951 = vmatpush1.bf16.msra.mxu0 0
        %952 = vmatprep.subr.bf16.mxu0 0
        %953 = vmatpush1.bf16.msra.mxu0 0
        %954 = vmatprep.subr.bf16.mxu0 0
        %955 = vmatpush1.bf16.msra.mxu0 0
        %956 = vmatprep.subr.bf16.mxu0 0
        %957 = vmatpush1.bf16.msra.mxu0 0
        %958 = vmatprep.mubr.bf16.mxu0 0
        %959 = vmatmul.mubr.bf16.gmra.mrb[0].mxu0 %v924
        %v960 = vpop.f32.mrb[0].mxu0
        %v961 = vadd.f32 0.0, %v960
        %v962 = vpop.f32.mrb[0].mxu0
        %v963 = vpop.f32.mrb[0].mxu0
        %v964 = vadd.f32 0.0, %v963
        %v965 = vpop.f32.mrb[0].mxu0
        %966 = vdwg.mxu0
        %967 = vrot.lane.b32.xlu0 %v850, 120
        %v968 = vpop.permute.xlu0 %967
        %969 = vrot.lane.b32.xlu0 %v850, 88
        %v970 = vpop.permute.xlu0 %969
        %v972 = vsel %vm854, %v968, 0
        %v975 = vsel %vm854, %v970, 0
        %977 = vmatprep.subr.bf16.mxu0 0
        %978 = vmatpush1.bf16.xpose.msra.mxu0 %v975
        %979 = vmatprep.subr.bf16.mxu0 0
        %980 = vmatpush1.bf16.xpose.msra.mxu0 0
        %981 = vmatprep.subr.bf16.mxu0 0
        %982 = vmatpush1.bf16.xpose.msra.mxu0 0
        %983 = vmatprep.subr.bf16.mxu0 0
        %984 = vmatpush1.bf16.xpose.msra.mxu0 0
        %985 = vmatprep.subr.bf16.mxu0 0
        %986 = vmatpush1.bf16.xpose.msra.mxu0 0
        %987 = vmatprep.subr.bf16.mxu0 0
        %988 = vmatpush1.bf16.xpose.msra.mxu0 0
        %989 = vmatprep.subr.bf16.mxu0 0
        %990 = vmatpush1.bf16.xpose.msra.mxu0 0
        %991 = vmatprep.subr.bf16.mxu0 0
        %992 = vmatpush1.bf16.xpose.msra.mxu0 0
        %993 = vmatprep.subr.bf16.mxu0 0
        %994 = vmatpush1.bf16.xpose.msra.mxu0 0
        %995 = vmatprep.subr.bf16.mxu0 0
        %996 = vmatpush1.bf16.xpose.msra.mxu0 0
        %997 = vmatprep.subr.bf16.mxu0 0
        %998 = vmatpush1.bf16.xpose.msra.mxu0 0
        %999 = vmatprep.subr.bf16.mxu0 0
        %1000 = vmatpush1.bf16.xpose.msra.mxu0 0
        %1001 = vmatprep.subr.bf16.mxu0 0
        %1002 = vmatpush1.bf16.xpose.msra.mxu0 0
        %1003 = vmatprep.subr.bf16.mxu0 0
        %1004 = vmatpush1.bf16.xpose.msra.mxu0 0
        %1005 = vmatprep.subr.bf16.mxu0 0
        %1006 = vmatpush1.bf16.xpose.msra.mxu0 0
        %1007 = vmatprep.subr.bf16.mxu0 0
        %1008 = vmatpush1.bf16.xpose.msra.mxu0 0
        %1009 = vmatprep.mubr.bf16.mxu0 0
        %1010 = vmatmul.mubr.bf16.gmra.mrb[0].mxu0 %v972
        %v1011 = vpop.f32.mrb[0].mxu0
        %v1012 = vadd.f32 0.0, %v1011
        %v1013 = vpop.f32.mrb[0].mxu0
        %v1014 = vpop.f32.mrb[0].mxu0
        %v1015 = vadd.f32 0.0, %v1014
        %v1016 = vpop.f32.mrb[0].mxu0
        %1017 = vdwg.mxu0
        %v1018 = vmul.f32 %v1012, 1.442695
        %v1019 = vpow.pop %v1018
        %v1020 = vmul.f32 %v1015, 1.442695
        %v1021 = vpow.pop %v1020
        %v1022 = vmul.f32 %v1019, %v734
        %v1023 = vmul.f32 %v1021, %v735
        %v1024 = vsel %vm908, %v1022, 0.0
        %1025 = vadd.xlane.f32.xlu0 %v1024
        %v1026 = vpop.xlane.xlu0 %1025
        %v1027 = vsel %vm908, %v1023, 0.0
        %1028 = vadd.xlane.f32.xlu0 %v1027
        %v1029 = vpop.xlane.xlu0 %1028
        %v1030 = vrcp.pop %v1026
        %v1031 = vrcp.pop %v1029
        %v1032 = vmul.f32 %v1022, %v1030
        %v1033 = vmul.f32 %v1023, %v1031
        %v1034 = vpack.c.bf16 %v1033, %v1032
        %1035 = vrot.lane.b32.xlu0 %v850, 56
        %v1036 = vpop.permute.xlu0 %1035
        %v1039 = vsel %vm908, %v1034, 0
        %1041 = vmatprep.subr.bf16.mxu0 0
        %1042 = vmatpush1.bf16.msra.mxu0 %v1036
        %1043 = vmatprep.subr.bf16.mxu0 0
        %1044 = vmatpush1.bf16.msra.mxu0 0
        %1045 = vmatprep.subr.bf16.mxu0 0
        %1046 = vmatpush1.bf16.msra.mxu0 0
        %1047 = vmatprep.subr.bf16.mxu0 0
        %1048 = vmatpush1.bf16.msra.mxu0 0
        %1049 = vmatprep.subr.bf16.mxu0 0
        %1050 = vmatpush1.bf16.msra.mxu0 0
        %1051 = vmatprep.subr.bf16.mxu0 0
        %1052 = vmatpush1.bf16.msra.mxu0 0
        %1053 = vmatprep.subr.bf16.mxu0 0
        %1054 = vmatpush1.bf16.msra.mxu0 0
        %1055 = vmatprep.subr.bf16.mxu0 0
        %1056 = vmatpush1.bf16.msra.mxu0 0
        %1057 = vmatprep.subr.bf16.mxu0 0
        %1058 = vmatpush1.bf16.msra.mxu0 0
        %1059 = vmatprep.subr.bf16.mxu0 0
        %1060 = vmatpush1.bf16.msra.mxu0 0
        %1061 = vmatprep.subr.bf16.mxu0 0
        %1062 = vmatpush1.bf16.msra.mxu0 0
        %1063 = vmatprep.subr.bf16.mxu0 0
        %1064 = vmatpush1.bf16.msra.mxu0 0
        %1065 = vmatprep.subr.bf16.mxu0 0
        %1066 = vmatpush1.bf16.msra.mxu0 0
        %1067 = vmatprep.subr.bf16.mxu0 0
        %1068 = vmatpush1.bf16.msra.mxu0 0
        %1069 = vmatprep.subr.bf16.mxu0 0
        %1070 = vmatpush1.bf16.msra.mxu0 0
        %1071 = vmatprep.subr.bf16.mxu0 0
        %1072 = vmatpush1.bf16.msra.mxu0 0
        %1073 = vmatprep.mubr.bf16.mxu0 0
        %1074 = vmatmul.mubr.bf16.gmra.mrb[0].mxu0 %v1039
        %v1075 = vpop.f32.mrb[0].mxu0
        %v1076 = vadd.f32 0.0, %v1075
        %v1077 = vpop.f32.mrb[0].mxu0
        %v1078 = vpop.f32.mrb[0].mxu0
        %v1079 = vadd.f32 0.0, %v1078
        %v1080 = vpop.f32.mrb[0].mxu0
        %1081 = vdwg.mxu0
        %1082 = vrot.lane.b32.xlu0 %v850, 112
        %v1083 = vpop.permute.xlu0 %1082
        %1084 = vrot.lane.b32.xlu0 %v850, 80
        %v1085 = vpop.permute.xlu0 %1084
        %v1087 = vsel %vm854, %v1083, 0
        %v1090 = vsel %vm854, %v1085, 0
        %1092 = vmatprep.subr.bf16.mxu0 0
        %1093 = vmatpush1.bf16.xpose.msra.mxu0 %v1090
        %1094 = vmatprep.subr.bf16.mxu0 0
        %1095 = vmatpush1.bf16.xpose.msra.mxu0 0
        %1096 = vmatprep.subr.bf16.mxu0 0
        %1097 = vmatpush1.bf16.xpose.msra.mxu0 0
        %1098 = vmatprep.subr.bf16.mxu0 0
        %1099 = vmatpush1.bf16.xpose.msra.mxu0 0
        %1100 = vmatprep.subr.bf16.mxu0 0
        %1101 = vmatpush1.bf16.xpose.msra.mxu0 0
        %1102 = vmatprep.subr.bf16.mxu0 0
        %1103 = vmatpush1.bf16.xpose.msra.mxu0 0
        %1104 = vmatprep.subr.bf16.mxu0 0
        %1105 = vmatpush1.bf16.xpose.msra.mxu0 0
        %1106 = vmatprep.subr.bf16.mxu0 0
        %1107 = vmatpush1.bf16.xpose.msra.mxu0 0
        %1108 = vmatprep.subr.bf16.mxu0 0
        %1109 = vmatpush1.bf16.xpose.msra.mxu0 0
        %1110 = vmatprep.subr.bf16.mxu0 0
        %1111 = vmatpush1.bf16.xpose.msra.mxu0 0
        %1112 = vmatprep.subr.bf16.mxu0 0
        %1113 = vmatpush1.bf16.xpose.msra.mxu0 0
        %1114 = vmatprep.subr.bf16.mxu0 0
        %1115 = vmatpush1.bf16.xpose.msra.mxu0 0
        %1116 = vmatprep.subr.bf16.mxu0 0
        %1117 = vmatpush1.bf16.xpose.msra.mxu0 0
        %1118 = vmatprep.subr.bf16.mxu0 0
        %1119 = vmatpush1.bf16.xpose.msra.mxu0 0
        %1120 = vmatprep.subr.bf16.mxu0 0
        %1121 = vmatpush1.bf16.xpose.msra.mxu0 0
        %1122 = vmatprep.subr.bf16.mxu0 0
        %1123 = vmatpush1.bf16.xpose.msra.mxu0 0
        %1124 = vmatprep.mubr.bf16.mxu0 0
        %1125 = vmatmul.mubr.bf16.gmra.mrb[0].mxu0 %v1087
        %v1126 = vpop.f32.mrb[0].mxu0
        %v1127 = vadd.f32 0.0, %v1126
        %v1128 = vpop.f32.mrb[0].mxu0
        %v1129 = vpop.f32.mrb[0].mxu0
        %v1130 = vadd.f32 0.0, %v1129
        %v1131 = vpop.f32.mrb[0].mxu0
        %1132 = vdwg.mxu0
        %v1133 = vmul.f32 %v1127, 1.442695
        %v1134 = vpow.pop %v1133
        %v1135 = vmul.f32 %v1130, 1.442695
        %v1136 = vpow.pop %v1135
        %v1137 = vmul.f32 %v1134, %v734
        %v1138 = vmul.f32 %v1136, %v735
        %v1139 = vsel %vm908, %v1137, 0.0
        %1140 = vadd.xlane.f32.xlu0 %v1139
        %v1141 = vpop.xlane.xlu0 %1140
        %v1142 = vsel %vm908, %v1138, 0.0
        %1143 = vadd.xlane.f32.xlu0 %v1142
        %v1144 = vpop.xlane.xlu0 %1143
        %v1145 = vrcp.pop %v1141
        %v1146 = vrcp.pop %v1144
        %v1147 = vmul.f32 %v1137, %v1145
        %v1148 = vmul.f32 %v1138, %v1146
        %v1149 = vpack.c.bf16 %v1148, %v1147
        %1150 = vrot.lane.b32.xlu0 %v850, 48
        %v1151 = vpop.permute.xlu0 %1150
        %v1154 = vsel %vm908, %v1149, 0
        %1156 = vmatprep.subr.bf16.mxu0 0
        %1157 = vmatpush1.bf16.msra.mxu0 %v1151
        %1158 = vmatprep.subr.bf16.mxu0 0
        %1159 = vmatpush1.bf16.msra.mxu0 0
        %1160 = vmatprep.subr.bf16.mxu0 0
        %1161 = vmatpush1.bf16.msra.mxu0 0
        %1162 = vmatprep.subr.bf16.mxu0 0
        %1163 = vmatpush1.bf16.msra.mxu0 0
        %1164 = vmatprep.subr.bf16.mxu0 0
        %1165 = vmatpush1.bf16.msra.mxu0 0
        %1166 = vmatprep.subr.bf16.mxu0 0
        %1167 = vmatpush1.bf16.msra.mxu0 0
        %1168 = vmatprep.subr.bf16.mxu0 0
        %1169 = vmatpush1.bf16.msra.mxu0 0
        %1170 = vmatprep.subr.bf16.mxu0 0
        %1171 = vmatpush1.bf16.msra.mxu0 0
        %1172 = vmatprep.subr.bf16.mxu0 0
        %1173 = vmatpush1.bf16.msra.mxu0 0
        %1174 = vmatprep.subr.bf16.mxu0 0
        %1175 = vmatpush1.bf16.msra.mxu0 0
        %1176 = vmatprep.subr.bf16.mxu0 0
        %1177 = vmatpush1.bf16.msra.mxu0 0
        %1178 = vmatprep.subr.bf16.mxu0 0
        %1179 = vmatpush1.bf16.msra.mxu0 0
        %1180 = vmatprep.subr.bf16.mxu0 0
        %1181 = vmatpush1.bf16.msra.mxu0 0
        %1182 = vmatprep.subr.bf16.mxu0 0
        %1183 = vmatpush1.bf16.msra.mxu0 0
        %1184 = vmatprep.subr.bf16.mxu0 0
        %1185 = vmatpush1.bf16.msra.mxu0 0
        %1186 = vmatprep.subr.bf16.mxu0 0
        %1187 = vmatpush1.bf16.msra.mxu0 0
        %1188 = vmatprep.mubr.bf16.mxu0 0
        %1189 = vmatmul.mubr.bf16.gmra.mrb[0].mxu0 %v1154
        %v1190 = vpop.f32.mrb[0].mxu0
        %v1191 = vadd.f32 0.0, %v1190
        %v1192 = vpop.f32.mrb[0].mxu0
        %v1193 = vpop.f32.mrb[0].mxu0
        %v1194 = vadd.f32 0.0, %v1193
        %v1195 = vpop.f32.mrb[0].mxu0
        %1196 = vdwg.mxu0
        %1197 = vrot.lane.b32.xlu0 %v850, 104
        %v1198 = vpop.permute.xlu0 %1197
        %1199 = vrot.lane.b32.xlu0 %v850, 72
        %v1200 = vpop.permute.xlu0 %1199
        %v1202 = vsel %vm854, %v1198, 0
        %v1205 = vsel %vm854, %v1200, 0
        %1207 = vmatprep.subr.bf16.mxu0 0
        %1208 = vmatpush1.bf16.xpose.msra.mxu0 %v1205
        %1209 = vmatprep.subr.bf16.mxu0 0
        %1210 = vmatpush1.bf16.xpose.msra.mxu0 0
        %1211 = vmatprep.subr.bf16.mxu0 0
        %1212 = vmatpush1.bf16.xpose.msra.mxu0 0
        %1213 = vmatprep.subr.bf16.mxu0 0
        %1214 = vmatpush1.bf16.xpose.msra.mxu0 0
        %1215 = vmatprep.subr.bf16.mxu0 0
        %1216 = vmatpush1.bf16.xpose.msra.mxu0 0
        %1217 = vmatprep.subr.bf16.mxu0 0
        %1218 = vmatpush1.bf16.xpose.msra.mxu0 0
        %1219 = vmatprep.subr.bf16.mxu0 0
        %1220 = vmatpush1.bf16.xpose.msra.mxu0 0
        %1221 = vmatprep.subr.bf16.mxu0 0
        %1222 = vmatpush1.bf16.xpose.msra.mxu0 0
        %1223 = vmatprep.subr.bf16.mxu0 0
        %1224 = vmatpush1.bf16.xpose.msra.mxu0 0
        %1225 = vmatprep.subr.bf16.mxu0 0
        %1226 = vmatpush1.bf16.xpose.msra.mxu0 0
        %1227 = vmatprep.subr.bf16.mxu0 0
        %1228 = vmatpush1.bf16.xpose.msra.mxu0 0
        %1229 = vmatprep.subr.bf16.mxu0 0
        %1230 = vmatpush1.bf16.xpose.msra.mxu0 0
        %1231 = vmatprep.subr.bf16.mxu0 0
        %1232 = vmatpush1.bf16.xpose.msra.mxu0 0
        %1233 = vmatprep.subr.bf16.mxu0 0
        %1234 = vmatpush1.bf16.xpose.msra.mxu0 0
        %1235 = vmatprep.subr.bf16.mxu0 0
        %1236 = vmatpush1.bf16.xpose.msra.mxu0 0
        %1237 = vmatprep.subr.bf16.mxu0 0
        %1238 = vmatpush1.bf16.xpose.msra.mxu0 0
        %1239 = vmatprep.mubr.bf16.mxu0 0
        %1240 = vmatmul.mubr.bf16.gmra.mrb[0].mxu0 %v1202
        %v1241 = vpop.f32.mrb[0].mxu0
        %v1242 = vadd.f32 0.0, %v1241
        %v1243 = vpop.f32.mrb[0].mxu0
        %v1244 = vpop.f32.mrb[0].mxu0
        %v1245 = vadd.f32 0.0, %v1244
        %v1246 = vpop.f32.mrb[0].mxu0
        %1247 = vdwg.mxu0
        %v1248 = vmul.f32 %v1242, 1.442695
        %v1249 = vpow.pop %v1248
        %v1250 = vmul.f32 %v1245, 1.442695
        %v1251 = vpow.pop %v1250
        %v1252 = vmul.f32 %v1249, %v734
        %v1253 = vmul.f32 %v1251, %v735
        %v1254 = vsel %vm908, %v1252, 0.0
        %1255 = vadd.xlane.f32.xlu0 %v1254
        %v1256 = vpop.xlane.xlu0 %1255
        %v1257 = vsel %vm908, %v1253, 0.0
        %1258 = vadd.xlane.f32.xlu0 %v1257
        %v1259 = vpop.xlane.xlu0 %1258
        %v1260 = vrcp.pop %v1256
        %v1261 = vrcp.pop %v1259
        %v1262 = vmul.f32 %v1252, %v1260
        %v1263 = vmul.f32 %v1253, %v1261
        %v1264 = vpack.c.bf16 %v1263, %v1262
        %1265 = vrot.lane.b32.xlu0 %v850, 40
        %v1266 = vpop.permute.xlu0 %1265
        %v1269 = vsel %vm908, %v1264, 0
        %1271 = vmatprep.subr.bf16.mxu0 0
        %1272 = vmatpush1.bf16.msra.mxu0 %v1266
        %1273 = vmatprep.subr.bf16.mxu0 0
        %1274 = vmatpush1.bf16.msra.mxu0 0
        %1275 = vmatprep.subr.bf16.mxu0 0
        %1276 = vmatpush1.bf16.msra.mxu0 0
        %1277 = vmatprep.subr.bf16.mxu0 0
        %1278 = vmatpush1.bf16.msra.mxu0 0
        %1279 = vmatprep.subr.bf16.mxu0 0
        %1280 = vmatpush1.bf16.msra.mxu0 0
        %1281 = vmatprep.subr.bf16.mxu0 0
        %1282 = vmatpush1.bf16.msra.mxu0 0
        %1283 = vmatprep.subr.bf16.mxu0 0
        %1284 = vmatpush1.bf16.msra.mxu0 0
        %1285 = vmatprep.subr.bf16.mxu0 0
        %1286 = vmatpush1.bf16.msra.mxu0 0
        %1287 = vmatprep.subr.bf16.mxu0 0
        %1288 = vmatpush1.bf16.msra.mxu0 0
        %1289 = vmatprep.subr.bf16.mxu0 0
        %1290 = vmatpush1.bf16.msra.mxu0 0
        %1291 = vmatprep.subr.bf16.mxu0 0
        %1292 = vmatpush1.bf16.msra.mxu0 0
        %1293 = vmatprep.subr.bf16.mxu0 0
        %1294 = vmatpush1.bf16.msra.mxu0 0
        %1295 = vmatprep.subr.bf16.mxu0 0
        %1296 = vmatpush1.bf16.msra.mxu0 0
        %1297 = vmatprep.subr.bf16.mxu0 0
        %1298 = vmatpush1.bf16.msra.mxu0 0
        %1299 = vmatprep.subr.bf16.mxu0 0
        %1300 = vmatpush1.bf16.msra.mxu0 0
        %1301 = vmatprep.subr.bf16.mxu0 0
        %1302 = vmatpush1.bf16.msra.mxu0 0
        %1303 = vmatprep.mubr.bf16.mxu0 0
        %1304 = vmatmul.mubr.bf16.gmra.mrb[0].mxu0 %v1269
        %v1305 = vpop.f32.mrb[0].mxu0
        %v1306 = vadd.f32 0.0, %v1305
        %v1307 = vpop.f32.mrb[0].mxu0
        %v1308 = vpop.f32.mrb[0].mxu0
        %v1309 = vadd.f32 0.0, %v1308
        %v1310 = vpop.f32.mrb[0].mxu0
        %1311 = vdwg.mxu0
        %1314 = vrot.lane.b32.xlu0 %v1076, 8
        %v1315 = vpop.permute.xlu0 %1314
        %1316 = vrot.lane.b32.xlu0 %v1079, 8
        %v1317 = vpop.permute.xlu0 %1316
        %1322 = vrot.lane.b32.xlu0 %v1191, 16
        %v1323 = vpop.permute.xlu0 %1322
        %1324 = vrot.lane.b32.xlu0 %v1194, 16
        %v1325 = vpop.permute.xlu0 %1324
        %1330 = vrot.lane.b32.xlu0 %v1306, 24
        %v1331 = vpop.permute.xlu0 %1330
        %1332 = vrot.lane.b32.xlu0 %v1309, 24
        %v1333 = vpop.permute.xlu0 %1332
        %v1336 = vsel %vm854, %v961, %v1315
        %v1337 = vsel %vm854, %v964, %v1317
        %v1338 = vsel %vm908, %v1336, %v1323
        %v1339 = vsel %vm908, %v1337, %v1325
        %vm1340 = vcmask 195584
        %v1341 = vsel %vm1340, %v1338, %v1331
        %v1342 = vsel %vm1340, %v1339, %v1333
        %v1343 = vpack.c.bf16 %v1342, %v1341
        %v1344 = vld [vmem:[%s661] sm:$0xf]
        %v1345 = vld [vmem:[%s661 + $0x4] sm:$0xf]
        %v1346 = vld [vmem:[%s661 + $0x8] sm:$0xf]
        %v1347 = vld [vmem:[%s661 + $0xc] sm:$0xf]
        %v1352 = vunpack.c.l.b16 %v1344
        %v1353 = vunpack.c.l.b16 %v1345
        %v1354 = vunpack.c.l.b16 %v1346
        %v1355 = vunpack.c.l.b16 %v1347
        %v1356 = vpack.c.b16 %v1353, %v1352
        %v1357 = vpack.c.b16 %v1355, %v1354
        %v1361 = vsel %vm738, %v1343, 0
        %1363 = vmatprep.subr.bf16.mxu0 0
        %1364 = vmatpush1.bf16.msra.mxu0 %v1356
        %1365 = vmatprep.subr.bf16.mxu0 0
        %1366 = vmatpush1.bf16.msra.mxu0 %v1357
        %1367 = vmatprep.subr.bf16.mxu0 0
        %1368 = vmatpush1.bf16.msra.mxu0 0
        %1369 = vmatprep.subr.bf16.mxu0 0
        %1370 = vmatpush1.bf16.msra.mxu0 0
        %1371 = vmatprep.subr.bf16.mxu0 0
        %1372 = vmatpush1.bf16.msra.mxu0 0
        %1373 = vmatprep.subr.bf16.mxu0 0
        %1374 = vmatpush1.bf16.msra.mxu0 0
        %1375 = vmatprep.subr.bf16.mxu0 0
        %1376 = vmatpush1.bf16.msra.mxu0 0
        %1377 = vmatprep.subr.bf16.mxu0 0
        %1378 = vmatpush1.bf16.msra.mxu0 0
        %1379 = vmatprep.subr.bf16.mxu0 0
        %1380 = vmatpush1.bf16.msra.mxu0 0
        %1381 = vmatprep.subr.bf16.mxu0 0
        %1382 = vmatpush1.bf16.msra.mxu0 0
        %1383 = vmatprep.subr.bf16.mxu0 0
        %1384 = vmatpush1.bf16.msra.mxu0 0
        %1385 = vmatprep.subr.bf16.mxu0 0
        %1386 = vmatpush1.bf16.msra.mxu0 0
        %1387 = vmatprep.subr.bf16.mxu0 0
        %1388 = vmatpush1.bf16.msra.mxu0 0
        %1389 = vmatprep.subr.bf16.mxu0 0
        %1390 = vmatpush1.bf16.msra.mxu0 0
        %1391 = vmatprep.subr.bf16.mxu0 0
        %1392 = vmatpush1.bf16.msra.mxu0 0
        %1393 = vmatprep.subr.bf16.mxu0 0
        %1394 = vmatpush1.bf16.msra.mxu0 0
        %1395 = vmatprep.mubr.bf16.mxu0 0
        %1396 = vmatmul.mubr.bf16.gmra.mrb[0].mxu0 %v1361
        %v1397 = vpop.f32.mrb[0].mxu0
        %v1398 = vadd.f32 0.0, %v1397
        %v1399 = vpop.f32.mrb[0].mxu0
        %v1400 = vpop.f32.mrb[0].mxu0
        %v1401 = vadd.f32 0.0, %v1400
        %v1402 = vpop.f32.mrb[0].mxu0
        %1403 = vdwg.mxu0
        %v1404 = vadd.f32 %v697, %v1398
        %v1405 = vadd.f32 %v698, %v1401
        %v1406 = vld [vmem:[%s664] sm:$0x1]
        %v1408 = vlaneseq
        %v1409 = vshrl.u32 %v1408, 7
        %v1410 = vsub.s32 0, %v1409
        %v1411 = vrot.slane %v1406, %v1410
        %v1413 = vadd.f32 %v1404, %v1411
        %v1414 = vadd.f32 %v1405, %v1411
        %v1415 = vld [vmem:[%s667] sm:$0x1]
        %v1416 = vld [vmem:[%s670] sm:$0x1]
        %v1417 = vsel %vm738, %v1413, 0.0
        %1418 = vadd.xlane.f32.xlu0 %v1417
        %v1419 = vpop.xlane.xlu0 %1418
        %v1420 = vsel %vm738, %v1414, 0.0
        %1421 = vadd.xlane.f32.xlu0 %v1420
        %v1422 = vpop.xlane.xlu0 %1421
        %v1423 = vmul.f32 %v1419, %v745
        %v1424 = vmul.f32 %v1422, %v745
        %v1425 = vsub.f32 %v1413, %v1423
        %v1426 = vsub.f32 %v1414, %v1424
        %v1427 = vmul.f32 %v1425, %v1425
        %v1428 = vmul.f32 %v1426, %v1426
        %v1429 = vsel %vm738, %v1427, 0.0
        %1430 = vadd.xlane.f32.xlu0 %v1429
        %v1431 = vpop.xlane.xlu0 %1430
        %v1432 = vsel %vm738, %v1428, 0.0
        %1433 = vadd.xlane.f32.xlu0 %v1432
        %v1434 = vpop.xlane.xlu0 %1433
        %v1435 = vmul.f32 %v1431, %v745
        %v1436 = vmul.f32 %v1434, %v745
        %v1437 = vadd.f32 %v1435, 1e-05
        %v1438 = vadd.f32 %v1436, 1e-05
        %v1439 = vrsqrt.pop %v1437
        %v1440 = vrsqrt.pop %v1438
        %v1441 = vmul.f32 %v1425, %v1439
        %v1442 = vmul.f32 %v1426, %v1440
        %v1444 = vlaneseq
        %v1445 = vshrl.u32 %v1444, 7
        %v1446 = vsub.s32 0, %v1445
        %v1447 = vrot.slane %v1415, %v1446
        %v1449 = vmul.f32 %v1441, %v1447
        %v1450 = vmul.f32 %v1442, %v1447
        %v1452 = vlaneseq
        %v1453 = vshrl.u32 %v1452, 7
        %v1454 = vsub.s32 0, %v1453
        %v1455 = vrot.slane %v1416, %v1454
        %v1457 = vadd.f32 %v1449, %v1455
        %v1458 = vadd.f32 %v1450, %v1455
        %v1459 = vpack.c.bf16 %v1458, %v1457
        %v1460 = vld [vmem:[%s675] sm:$0xf]
        %v1461 = vld [vmem:[%s675 + $0x4] sm:$0xf]
        %v1462 = vld [vmem:[%s675 + $0x8] sm:$0xf]
        %v1463 = vld [vmem:[%s675 + $0xc] sm:$0xf]
        %v1464 = vld [vmem:[%s678] sm:$0x1]
        %v1466 = vlaneseq
        %v1467 = vshrl.u32 %v1466, 7
        %v1468 = vsub.s32 0, %v1467
        %v1469 = vrot.slane %v1464, %v1468
        %v1475 = vunpack.c.l.b16 %v1460
        %v1476 = vunpack.c.l.b16 %v1461
        %v1477 = vunpack.c.l.b16 %v1462
        %v1478 = vunpack.c.l.b16 %v1463
        %v1479 = vpack.c.b16 %v1476, %v1475
        %v1480 = vpack.c.b16 %v1478, %v1477
        %v1484 = vsel %vm738, %v1459, 0
        %1486 = vmatprep.subr.bf16.mxu0 0
        %1487 = vmatpush1.bf16.msra.mxu0 %v1479
        %1488 = vmatprep.subr.bf16.mxu0 0
        %1489 = vmatpush1.bf16.msra.mxu0 %v1480
        %1490 = vmatprep.subr.bf16.mxu0 0
        %1491 = vmatpush1.bf16.msra.mxu0 0
        %1492 = vmatprep.subr.bf16.mxu0 0
        %1493 = vmatpush1.bf16.msra.mxu0 0
        %1494 = vmatprep.subr.bf16.mxu0 0
        %1495 = vmatpush1.bf16.msra.mxu0 0
        %1496 = vmatprep.subr.bf16.mxu0 0
        %1497 = vmatpush1.bf16.msra.mxu0 0
        %1498 = vmatprep.subr.bf16.mxu0 0
        %1499 = vmatpush1.bf16.msra.mxu0 0
        %1500 = vmatprep.subr.bf16.mxu0 0
        %1501 = vmatpush1.bf16.msra.mxu0 0
        %1502 = vmatprep.subr.bf16.mxu0 0
        %1503 = vmatpush1.bf16.msra.mxu0 0
        %1504 = vmatprep.subr.bf16.mxu0 0
        %1505 = vmatpush1.bf16.msra.mxu0 0
        %1506 = vmatprep.subr.bf16.mxu0 0
        %1507 = vmatpush1.bf16.msra.mxu0 0
        %1508 = vmatprep.subr.bf16.mxu0 0
        %1509 = vmatpush1.bf16.msra.mxu0 0
        %1510 = vmatprep.subr.bf16.mxu0 0
        %1511 = vmatpush1.bf16.msra.mxu0 0
        %1512 = vmatprep.subr.bf16.mxu0 0
        %1513 = vmatpush1.bf16.msra.mxu0 0
        %1514 = vmatprep.subr.bf16.mxu0 0
        %1515 = vmatpush1.bf16.msra.mxu0 0
        %1516 = vmatprep.subr.bf16.mxu0 0
        %1517 = vmatpush1.bf16.msra.mxu0 0
        %1518 = vmatprep.mubr.bf16.mxu0 0
        %1519 = vmatmul.mubr.bf16.gmra.mrb[0].mxu0 %v1484
        %v1520 = vpop.f32.mrb[0].mxu0
        %v1521 = vadd.f32 %v1469, %v1520
        %v1522 = vpop.f32.mrb[0].mxu0
        %v1523 = vpop.f32.mrb[0].mxu0
        %v1524 = vadd.f32 %v1469, %v1523
        %v1525 = vpop.f32.mrb[0].mxu0
        %1526 = vdwg.mxu0
        %v1527 = vmul.f32 %v1521, 1.702
        %v1528 = vmul.f32 %v1524, 1.702
        %v1529 = vxor.u32 %v1527, 2147483648
        %v1530 = vxor.u32 %v1528, 2147483648
        %v1531 = vmul.f32 %v1529, 1.442695
        %v1532 = vpow.pop %v1531
        %v1533 = vmul.f32 %v1530, 1.442695
        %v1534 = vpow.pop %v1533
        %v1535 = vadd.f32 %v1532, 1.0
        %v1536 = vadd.f32 %v1534, 1.0
        %v1537 = vrcp.pop %v1535
        %v1538 = vmul.f32 1.0, %v1537
        %v1539 = vrcp.pop %v1536
        %v1540 = vmul.f32 1.0, %v1539
        %v1541 = vmul.f32 %v1521, %v1538
        %v1542 = vmul.f32 %v1524, %v1540
        %v1543 = vpack.c.bf16 %v1542, %v1541
        %v1544 = vld [vmem:[%s683] sm:$0xf]
        %v1545 = vld [vmem:[%s683 + $0x4] sm:$0xf]
        %v1546 = vld [vmem:[%s683 + $0x8] sm:$0xf]
        %v1547 = vld [vmem:[%s683 + $0xc] sm:$0xf]
        %v1548 = vld [vmem:[%s683 + $0x10] sm:$0xf]
        %v1549 = vld [vmem:[%s683 + $0x14] sm:$0xf]
        %v1550 = vld [vmem:[%s683 + $0x18] sm:$0xf]
        %v1551 = vld [vmem:[%s683 + $0x1c] sm:$0xf]
        %v1552 = vld [vmem:[%s683 + $0x20] sm:$0xf]
        %v1553 = vld [vmem:[%s683 + $0x24] sm:$0xf]
        %v1554 = vld [vmem:[%s683 + $0x28] sm:$0xf]
        %v1555 = vld [vmem:[%s683 + $0x2c] sm:$0xf]
        %v1556 = vld [vmem:[%s683 + $0x30] sm:$0xf]
        %v1557 = vld [vmem:[%s683 + $0x34] sm:$0xf]
        %v1558 = vld [vmem:[%s683 + $0x38] sm:$0xf]
        %v1559 = vld [vmem:[%s683 + $0x3c] sm:$0xf]
        %v1576 = vunpack.c.l.b16 %v1544
        %v1577 = vunpack.c.l.b16 %v1545
        %v1578 = vunpack.c.l.b16 %v1546
        %v1579 = vunpack.c.l.b16 %v1547
        %v1580 = vunpack.c.l.b16 %v1548
        %v1581 = vunpack.c.l.b16 %v1549
        %v1582 = vunpack.c.l.b16 %v1550
        %v1583 = vunpack.c.l.b16 %v1551
        %v1584 = vunpack.c.l.b16 %v1552
        %v1585 = vunpack.c.l.b16 %v1553
        %v1586 = vunpack.c.l.b16 %v1554
        %v1587 = vunpack.c.l.b16 %v1555
        %v1588 = vunpack.c.l.b16 %v1556
        %v1589 = vunpack.c.l.b16 %v1557
        %v1590 = vunpack.c.l.b16 %v1558
        %v1591 = vunpack.c.l.b16 %v1559
        %v1592 = vpack.c.b16 %v1577, %v1576
        %v1593 = vpack.c.b16 %v1579, %v1578
        %v1594 = vpack.c.b16 %v1581, %v1580
        %v1595 = vpack.c.b16 %v1583, %v1582
        %v1596 = vpack.c.b16 %v1585, %v1584
        %v1597 = vpack.c.b16 %v1587, %v1586
        %v1598 = vpack.c.b16 %v1589, %v1588
        %v1599 = vpack.c.b16 %v1591, %v1590
        %1608 = vmatprep.subr.bf16.mxu0 0
        %1609 = vmatpush1.bf16.msra.mxu0 %v1592
        %1610 = vmatprep.subr.bf16.mxu0 0
        %1611 = vmatpush1.bf16.msra.mxu0 %v1593
        %1612 = vmatprep.subr.bf16.mxu0 0
        %1613 = vmatpush1.bf16.msra.mxu0 %v1594
        %1614 = vmatprep.subr.bf16.mxu0 0
        %1615 = vmatpush1.bf16.msra.mxu0 %v1595
        %1616 = vmatprep.subr.bf16.mxu0 0
        %1617 = vmatpush1.bf16.msra.mxu0 %v1596
        %1618 = vmatprep.subr.bf16.mxu0 0
        %1619 = vmatpush1.bf16.msra.mxu0 %v1597
        %1620 = vmatprep.subr.bf16.mxu0 0
        %1621 = vmatpush1.bf16.msra.mxu0 %v1598
        %1622 = vmatprep.subr.bf16.mxu0 0
        %1623 = vmatpush1.bf16.msra.mxu0 %v1599
        %1624 = vmatprep.subr.bf16.mxu0 0
        %1625 = vmatpush1.bf16.msra.mxu0 0
        %1626 = vmatprep.subr.bf16.mxu0 0
        %1627 = vmatpush1.bf16.msra.mxu0 0
        %1628 = vmatprep.subr.bf16.mxu0 0
        %1629 = vmatpush1.bf16.msra.mxu0 0
        %1630 = vmatprep.subr.bf16.mxu0 0
        %1631 = vmatpush1.bf16.msra.mxu0 0
        %1632 = vmatprep.subr.bf16.mxu0 0
        %1633 = vmatpush1.bf16.msra.mxu0 0
        %1634 = vmatprep.subr.bf16.mxu0 0
        %1635 = vmatpush1.bf16.msra.mxu0 0
        %1636 = vmatprep.subr.bf16.mxu0 0
        %1637 = vmatpush1.bf16.msra.mxu0 0
        %1638 = vmatprep.subr.bf16.mxu0 0
        %1639 = vmatpush1.bf16.msra.mxu0 0
        %1640 = vmatprep.mubr.bf16.mxu0 0
        %1641 = vmatmul.mubr.bf16.gmra.mrb[0].mxu0 %v1543
        %v1642 = vpop.f32.mrb[0].mxu0
        %v1643 = vadd.f32 0.0, %v1642
        %v1644 = vpop.f32.mrb[0].mxu0
        %v1645 = vpop.f32.mrb[0].mxu0
        %v1646 = vadd.f32 0.0, %v1645
        %v1647 = vpop.f32.mrb[0].mxu0
        %1648 = vdwg.mxu0
        %v1649 = vadd.f32 %v1413, %v1643
        %v1650 = vadd.f32 %v1414, %v1646
        %v1651 = vld [vmem:[%s686] sm:$0x1]
        %v1653 = vlaneseq
        %v1654 = vshrl.u32 %v1653, 7
        %v1655 = vsub.s32 0, %v1654
        %v1656 = vrot.slane %v1651, %v1655
        %v1658 = vadd.f32 %v1649, %v1656
        %v1659 = vadd.f32 %v1650, %v1656
        %1660 = vst.msk [vmem:[#allocation2] sm:$0xff] %vm738, %v1658
        %1661 = vst.msk [vmem:[#allocation2 + $0x8] sm:$0xff] %vm738, %v1659
        %p1662 = scmp.eq.s32.totalorder %s35, 1
        // Predicated region
        $region89: #{tpu_custom_call.1} parent=83 // pred_check
          %p1663 = pneg %p1662
        $region90: #{tpu_custom_call.1} parent=83 // pred_check_branch
          %1665 = sbr.rel (%p1663) target = $region92
        $region91: #{tpu_custom_call.1} parent=83 // pred_region
          %s1666 = sld [smem:[#allocation4]]
          %v1667 = vstv %s1666
          %vm1668 = vcmp.eq.s32.totalorder %v703, %v1667
          %v1669 = vsel %vm1668, 1, 0
          %v1670 = vcvt.s32.f32 %v1669
          %s1671 = sld [smem:[#allocation4 + $0x1]]
          %s1672 = sadd.s32 %s1671, 8
          %v1673 = vstv %s1672
          %vm1674 = vcmp.eq.s32.totalorder %v703, %v1673
          %v1675 = vsel %vm1674, 1, 0
          %v1676 = vcvt.s32.f32 %v1675
          %vm1677 = vcmask 1040384
          %v1678 = vsel %vm1677, %v1670, %v1676
          %v1680 = vsel %vm908, %v1678, 0
          %1682 = vmatprep.subr.mxu0 0.0
          %1683 = vmatpush1.msra.mxu0 %v1658
          %1684 = vmatprep.subr.mxu0 0.0
          %1685 = vmatpush1.msra.mxu0 %v1659
          %1686 = vmatprep.subr.mxu0 0.0
          %1687 = vmatpush1.msra.mxu0 0.0
          %1688 = vmatprep.subr.mxu0 0.0
          %1689 = vmatpush1.msra.mxu0 0.0
          %1690 = vmatprep.subr.mxu0 0.0
          %1691 = vmatpush1.msra.mxu0 0.0
          %1692 = vmatprep.subr.mxu0 0.0
          %1693 = vmatpush1.msra.mxu0 0.0
          %1694 = vmatprep.subr.mxu0 0.0
          %1695 = vmatpush1.msra.mxu0 0.0
          %1696 = vmatprep.subr.mxu0 0.0
          %1697 = vmatpush1.msra.mxu0 0.0
          %1698 = vmatprep.subr.mxu0 0.0
          %1699 = vmatpush1.msra.mxu0 0.0
          %1700 = vmatprep.subr.mxu0 0.0
          %1701 = vmatpush1.msra.mxu0 0.0
          %1702 = vmatprep.subr.mxu0 0.0
          %1703 = vmatpush1.msra.mxu0 0.0
          %1704 = vmatprep.subr.mxu0 0.0
          %1705 = vmatpush1.msra.mxu0 0.0
          %1706 = vmatprep.subr.mxu0 0.0
          %1707 = vmatpush1.msra.mxu0 0.0
          %1708 = vmatprep.subr.mxu0 0.0
          %1709 = vmatpush1.msra.mxu0 0.0
          %1710 = vmatprep.subr.mxu0 0.0
          %1711 = vmatpush1.msra.mxu0 0.0
          %1712 = vmatprep.subr.mxu0 0.0
          %1713 = vmatpush1.msra.mxu0 0.0
          %1714 = vmatprep.subr.mxu0 0.0
          %1715 = vmatpush1.msra.mxu0 0.0
          %1716 = vmatprep.subr.mxu0 0.0
          %1717 = vmatpush1.msra.mxu0 0.0
          %1718 = vmatprep.subr.mxu0 0.0
          %1719 = vmatpush1.msra.mxu0 0.0
          %1720 = vmatprep.subr.mxu0 0.0
          %1721 = vmatpush1.msra.mxu0 0.0
          %1722 = vmatprep.subr.mxu0 0.0
          %1723 = vmatpush1.msra.mxu0 0.0
          %1724 = vmatprep.subr.mxu0 0.0
          %1725 = vmatpush1.msra.mxu0 0.0
          %1726 = vmatprep.subr.mxu0 0.0
          %1727 = vmatpush1.msra.mxu0 0.0
          %1728 = vmatprep.subr.mxu0 0.0
          %1729 = vmatpush1.msra.mxu0 0.0
          %1730 = vmatprep.subr.mxu0 0.0
          %1731 = vmatpush1.msra.mxu0 0.0
          %1732 = vmatprep.subr.mxu0 0.0
          %1733 = vmatpush1.msra.mxu0 0.0
          %1734 = vmatprep.subr.mxu0 0.0
          %1735 = vmatpush1.msra.mxu0 0.0
          %1736 = vmatprep.subr.mxu0 0.0
          %1737 = vmatpush1.msra.mxu0 0.0
          %1738 = vmatprep.subr.mxu0 0.0
          %1739 = vmatpush1.msra.mxu0 0.0
          %1740 = vmatprep.subr.mxu0 0.0
          %1741 = vmatpush1.msra.mxu0 0.0
          %1742 = vmatprep.subr.mxu0 0.0
          %1743 = vmatpush1.msra.mxu0 0.0
          %1744 = vmatprep.subr.mxu0 0.0
          %1745 = vmatpush1.msra.mxu0 0.0
          %1746 = vmatprep.mubr.f32.mxu0 0.0
          %1747 = vmatmul.mubr.f32.gmra.mrb[0].mxu0 %v1680
          %v1748 = vpop.f32.mrb[0].mxu0
          %v1749 = vadd.f32 0.0, %v1748
          %v1750 = vpop.f32.mrb[0].mxu0
          %1751 = vdwg.mxu0
          %v1752 = vld [vmem:[%s14] sm:$0x1]
          %v1753 = vld [vmem:[%s15] sm:$0x1]
          %vm1754 = vcmask 254976
          %v1755 = vsel %vm1754, %v1749, 0.0
          %1756 = vadd.xlane.f32.xlu0 %v1755
          %v1757 = vpop.xlane.xlu0 %1756
          %v1758 = vmul.f32 %v1757, %v745
          %v1759 = vsub.f32 %v1749, %v1758
          %v1760 = vmul.f32 %v1759, %v1759
          %v1761 = vsel %vm1754, %v1760, 0.0
          %1762 = vadd.xlane.f32.xlu0 %v1761
          %v1763 = vpop.xlane.xlu0 %1762
          %v1764 = vmul.f32 %v1763, %v745
          %v1765 = vadd.f32 %v1764, 1e-05
          %v1766 = vrsqrt.pop %v1765
          %v1767 = vmul.f32 %v1759, %v1766
          %v1769 = vlaneseq
          %v1770 = vshrl.u32 %v1769, 7
          %v1771 = vsub.s32 0, %v1770
          %v1772 = vrot.slane %v1752, %v1771
          %v1774 = vmul.f32 %v1767, %v1772
          %v1776 = vlaneseq
          %v1777 = vshrl.u32 %v1776, 7
          %v1778 = vsub.s32 0, %v1777
          %v1779 = vrot.slane %v1753, %v1778
          %v1781 = vadd.f32 %v1774, %v1779
          %v1782 = vld [vmem:[%s16] sm:$0xff]
          %v1783 = vld [vmem:[%s16 + $0x8] sm:$0xff]
          %v1784 = vld [vmem:[%s16 + $0x10] sm:$0xff]
          %v1785 = vld [vmem:[%s16 + $0x18] sm:$0xff]
          %v1787 = vsel %vm738, %v1781, 0
          %1789 = vmatprep.subr.mxu0 0.0
          %1790 = vmatpush1.msra.mxu0 %v1782
          %1791 = vmatprep.subr.mxu0 0.0
          %1792 = vmatpush1.msra.mxu0 %v1783
          %1793 = vmatprep.subr.mxu0 0.0
          %1794 = vmatpush1.msra.mxu0 %v1784
          %1795 = vmatprep.subr.mxu0 0.0
          %1796 = vmatpush1.msra.mxu0 %v1785
          %1797 = vmatprep.subr.mxu0 0.0
          %1798 = vmatpush1.msra.mxu0 0.0
          %1799 = vmatprep.subr.mxu0 0.0
          %1800 = vmatpush1.msra.mxu0 0.0
          %1801 = vmatprep.subr.mxu0 0.0
          %1802 = vmatpush1.msra.mxu0 0.0
          %1803 = vmatprep.subr.mxu0 0.0
          %1804 = vmatpush1.msra.mxu0 0.0
          %1805 = vmatprep.subr.mxu0 0.0
          %1806 = vmatpush1.msra.mxu0 0.0
          %1807 = vmatprep.subr.mxu0 0.0
          %1808 = vmatpush1.msra.mxu0 0.0
          %1809 = vmatprep.subr.mxu0 0.0
          %1810 = vmatpush1.msra.mxu0 0.0
          %1811 = vmatprep.subr.mxu0 0.0
          %1812 = vmatpush1.msra.mxu0 0.0
          %1813 = vmatprep.subr.mxu0 0.0
          %1814 = vmatpush1.msra.mxu0 0.0
          %1815 = vmatprep.subr.mxu0 0.0
          %1816 = vmatpush1.msra.mxu0 0.0
          %1817 = vmatprep.subr.mxu0 0.0
          %1818 = vmatpush1.msra.mxu0 0.0
          %1819 = vmatprep.subr.mxu0 0.0
          %1820 = vmatpush1.msra.mxu0 0.0
          %1821 = vmatprep.subr.mxu0 0.0
          %1822 = vmatpush1.msra.mxu0 0.0
          %1823 = vmatprep.subr.mxu0 0.0
          %1824 = vmatpush1.msra.mxu0 0.0
          %1825 = vmatprep.subr.mxu0 0.0
          %1826 = vmatpush1.msra.mxu0 0.0
          %1827 = vmatprep.subr.mxu0 0.0
          %1828 = vmatpush1.msra.mxu0 0.0
          %1829 = vmatprep.subr.mxu0 0.0
          %1830 = vmatpush1.msra.mxu0 0.0
          %1831 = vmatprep.subr.mxu0 0.0
          %1832 = vmatpush1.msra.mxu0 0.0
          %1833 = vmatprep.subr.mxu0 0.0
          %1834 = vmatpush1.msra.mxu0 0.0
          %1835 = vmatprep.subr.mxu0 0.0
          %1836 = vmatpush1.msra.mxu0 0.0
          %1837 = vmatprep.subr.mxu0 0.0
          %1838 = vmatpush1.msra.mxu0 0.0
          %1839 = vmatprep.subr.mxu0 0.0
          %1840 = vmatpush1.msra.mxu0 0.0
          %1841 = vmatprep.subr.mxu0 0.0
          %1842 = vmatpush1.msra.mxu0 0.0
          %1843 = vmatprep.subr.mxu0 0.0
          %1844 = vmatpush1.msra.mxu0 0.0
          %1845 = vmatprep.subr.mxu0 0.0
          %1846 = vmatpush1.msra.mxu0 0.0
          %1847 = vmatprep.subr.mxu0 0.0
          %1848 = vmatpush1.msra.mxu0 0.0
          %1849 = vmatprep.subr.mxu0 0.0
          %1850 = vmatpush1.msra.mxu0 0.0
          %1851 = vmatprep.subr.mxu0 0.0
          %1852 = vmatpush1.msra.mxu0 0.0
          %1853 = vmatprep.mubr.f32.mxu0 0.0
          %1854 = vmatmul.mubr.f32.gmra.mrb[0].mxu0 %v1787
          %v1855 = vpop.f32.mrb[0].mxu0
          %v1856 = vadd.f32 0.0, %v1855
          %v1857 = vpop.f32.mrb[0].mxu0
          %1858 = vdwg.mxu0
          %vm1859 = vcmask 123904
          %1860 = vst.msk [vmem:[#allocation5] sm:$0x3] %vm1859, %v1856
        $region92: #{tpu_custom_call.1} parent=83 // pred_fallthru
          _
        // Predicated region
        $region93: #{tpu_custom_call.1} parent=83 // pred_check
          %p1861 = pneg %p444
        $region94: #{tpu_custom_call.1} parent=83 // pred_check_branch
          %1863 = sbr.rel (%p1861) target = $region96
        $region95: #{tpu_custom_call.1} parent=83 // pred_region
          %s1865 = ssub.s32 32, 32
          %1866 = vsyncadd [#allocation6], %s1865
          %s1868 = sshll.u32 [#allocation5], 4
          %s1869 = int_to_ptr.vmem [resolvable:$true] %s1868
          %1871 = dma.vmem_to_hbm [thread:$0]  %s1869, 32, %s17, [#allocation6]
        $region96: #{tpu_custom_call.1} parent=83 // pred_fallthru
          _
        // Predicated region
        $region97: #{tpu_custom_call.1} parent=83 // pred_check
          %p1872 = pneg %p444
        $region98: #{tpu_custom_call.1} parent=83 // pred_check_branch
          %1874 = sbr.rel (%p1872) target = $region100
        $region99: #{tpu_custom_call.1} parent=83 // pred_region
          %1875 = dma.done [#allocation6], 32
        $region100: #{tpu_custom_call.1} parent=83 // pred_fallthru
          _
      $region84: #{tpu_custom_call.1} parent=5 // pred_fallthru
        _
      %p1876 = scmp.le.s32.totalorder 2, %s30
      // Predicated region
      $region101: #{tpu_custom_call.1} parent=5 // pred_check
        %p1877 = pneg %p1876
      $region102: #{tpu_custom_call.1} parent=5 // pred_check_branch
        %1879 = sbr.rel (%p1877) target = $region104
      $region103: #{tpu_custom_call.1} parent=5 // pred_region
        %s1880 = ssub.s32 %s30, 2
      $region104: #{tpu_custom_call.1} parent=5 // pred_fallthru
        _
    $region6: #{tpu_custom_call.1} parent=1 // loop_footer
      %s34 = sadd.s32 1, %s30
    $region7: #{tpu_custom_call.1} parent=1 // loop_footer_branch
      %29 = sbr.rel target = $region3
    $region8: #{tpu_custom_call.1} parent=1 // loop_exit
      _
    %1881 = vsyncpa [#allocation6], 1
    %s1882 = scalar_lea.sflag [#allocation6], 1
    %1883 = vsyncpa %s1882, 1

</llo_original>
